<compile_context>
chip_gen: v5e
topology: v5e:2x2
jax: 0.10.0
libtpu: 0.0.40
codegen_flags: <defaults>
</compile_context>

<pallas_src>
import jax
import jax.numpy as jnp
from jax.experimental import pallas as pl
from jax.experimental.pallas import tpu as pltpu


def _round_up(x, m):
    return (x + m - 1) // m * m


def _pick_tk(n_feat, target=2048):
    """Largest K tile <= target (multiple of 128) that divides n_feat."""
    if n_feat <= target:
        return n_feat
    tk = target
    while tk >= 128:
        if n_feat % tk == 0:
            return tk
        tk -= 128
    return n_feat  # no aligned divisor found -> fall back to a single K step


# ----------------------------------------------------------------------------
# Fused MLP kernel: relu(relu(x @ W1 + b1) @ W2 + b2) @ W3 + b3
# Grid = (batch tiles ["parallel"], K tiles ["arbitrary"]).
# ----------------------------------------------------------------------------
def _mlp_kernel(x_ref, w1_ref, b1_ref, w2_ref, b2_ref, w3_ref, b3_ref,
                o_ref, acc_ref):
    # x_ref : (tm, tk)  f32   -- streamed over K
    # w1_ref: (tk, 256) bf16  -- streamed over K (double-buffered by default)
    # b*/w2/w3: constant blocks, single-buffered (pl.Buffered(1))
    # acc_ref: (tm, 256) f32 VMEM scratch, persists across the K axis
    k = pl.program_id(1)

    @pl.when(k == 0)
    def _init():
        acc_ref[...] = jnp.zeros_like(acc_ref)

    # Cast the f32 activations to bf16 in-register (halves activation HBM
    # traffic vs. a wrapper-side cast); f32 accumulation on the MXU.
    acc_ref[...] += jnp.dot(x_ref[...].astype(jnp.bfloat16), w1_ref[...],
                            preferred_element_type=jnp.float32)

    @pl.when(k == pl.num_programs(1) - 1)
    def _finalize():
        h = jnp.maximum(acc_ref[...] + b1_ref[...], 0.0)
        h = jnp.dot(h.astype(jnp.bfloat16), w2_ref[...],
                    preferred_element_type=jnp.float32)
        h = jnp.maximum(h + b2_ref[...], 0.0)
        h = jnp.dot(h.astype(jnp.bfloat16), w3_ref[...],
                    preferred_element_type=jnp.float32)
        o_ref[...] = (h + b3_ref[...]).astype(o_ref.dtype)


# ----------------------------------------------------------------------------
# One-time parameter preparation (outside the per-step / jitted path).
# ----------------------------------------------------------------------------
def prepare_linear_params(params):
    """Convert f32 PyTorch-style params into kernel layout: bf16 weights,
    (1, H) f32 biases.  Call ONCE; do not re-cast per forward call."""
    prepared = {}
    for idx in (1, 2, 3):
        prepared[f"w{idx}"] = params[f"w{idx}"].astype(jnp.bfloat16)
        prepared[f"b{idx}"] = params[f"b{idx}"].reshape(1, -1).astype(jnp.float32)
    return prepared


def linear_forward(features_map, prepared, *, max_tm=128, tk_target=2048):
    """Pallas implementation of `linear.forward`.

    features_map: any float array whose element count is a multiple of n_feat
                  (e.g. (B, 256, fm, fm), PyTorch NCHW).  Returns (B, out_size).
    prepared:     output of prepare_linear_params (bf16 weights, f32 biases).
    """
    w1, b1 = prepared["w1"], prepared["b1"]
    w2, b2 = prepared["w2"], prepared["b2"]
    w3, b3 = prepared["w3"], prepared["b3"]
    n_feat, h1 = w1.shape
    h2 = w2.shape[1]
    out_size = w3.shape[1]

    x = features_map.reshape(-1, n_feat)        # == torch .view(-1, n_feat), f32
    batch = x.shape[0]

    # Batch tile: sublane-aligned; no jnp.pad -- cdiv grid + masked last block.
    # TODO(synk): on v6e/v7x with large batches, raise max_tm to 256 (2x256 MXU
    # rows); keep 128 on v5e (128x128 MXU).
    tm = min(max_tm, _round_up(batch, 8))
    tk = _pick_tk(n_feat, tk_target)
    grid = (pl.cdiv(batch, tm), n_feat // tk)

    # Constant-index operands: single-buffer (a second buffer is pure waste).
    resident = dict(pipeline_mode=pl.Buffered(1))

    grid_spec = pltpu.PrefetchScalarGridSpec(
        num_scalar_prefetch=0,
        grid=grid,
        in_specs=[
            pl.BlockSpec((tm, tk), lambda i, k: (i, k)),            # x  (f32)
            pl.BlockSpec((tk, h1), lambda i, k: (k, 0)),            # W1 (bf16)
            pl.BlockSpec((1, h1), lambda i, k: (0, 0), **resident),   # b1
            pl.BlockSpec((h1, h2), lambda i, k: (0, 0), **resident),  # W2
            pl.BlockSpec((1, h2), lambda i, k: (0, 0), **resident),   # b2
            pl.BlockSpec((h2, out_size), lambda i, k: (0, 0), **resident),  # W3
            pl.BlockSpec((1, out_size), lambda i, k: (0, 0), **resident),   # b3
        ],
        out_specs=pl.BlockSpec((tm, out_size), lambda i, k: (i, 0)),
        scratch_shapes=[pltpu.VMEM((tm, h1), jnp.float32)],          # layer-1 acc
    )
    return pl.pallas_call(
        _mlp_kernel,
        out_shape=jax.ShapeDtypeStruct((batch, out_size), jnp.float32),
        grid_spec=grid_spec,
        compiler_params=pltpu.CompilerParams(
            dimension_semantics=("parallel", "arbitrary"),
            vmem_limit_bytes=32 * 1024 * 1024,   # safe on v5e/v6e/v7x
        ),
    )(x, w1, b1, w2, b2, w3, b3)


# ----------------------------------------------------------------------------
# Parameters (synthetic, matching nn.Linear's default U(+-1/sqrt(fan_in)) init)
# ----------------------------------------------------------------------------
def init_linear_params(key, out_size=128, input_feat_sz=32):
    feat_map_sz = input_feat_sz // 4
    n_feat = int(256 * feat_map_sz * feat_map_sz)
    dims = (n_feat, 256, 128, out_size)
    params = {}
    for idx, (fin, fout) in enumerate(zip(dims[:-1], dims[1:]), start=1):
        k = jax.random.fold_in(key, idx)
        kw, kb = jax.random.split(k)
        bound = 1.0 / float(fin) ** 0.5
        params[f"w{idx}"] = jax.random.uniform(
            kw, (fin, fout), jnp.float32, -bound, bound)
        params[f"b{idx}"] = jax.random.uniform(
            kb, (fout,), jnp.float32, -bound, bound)
    return params


def linear_reference(features_map, params):
    """Pure-JAX f32 reference (same math) for correctness checking."""
    n_feat = params["w1"].shape[0]
    x = features_map.reshape(-1, n_feat)
    h = jnp.maximum(x @ params["w1"] + params["b1"], 0.0)
    h = jnp.maximum(h @ params["w2"] + params["b2"], 0.0)
    return h @ params["w3"] + params["b3"]


if __name__ == "__main__":
    key = jax.random.PRNGKey(0)
    k_params, k_x = jax.random.split(key)

    # Defaults from the module: out_size=128, input_feat_sz=32 -> n_feat=16384.
    params = init_linear_params(k_params, out_size=128, input_feat_sz=32)
    prepared = prepare_linear_params(params)        # one-time bf16 conversion

    # features_map as produced upstream: (B, 256, feat_map_sz, feat_map_sz).
    x = jax.random.normal(k_x, (2, 256, 8, 8), jnp.float32)

    out = jax.block_until_ready(jax.jit(linear_forward)(x, prepared))
    assert out.shape == (2, 128), out.shape

    ref = jax.block_until_ready(linear_reference(x, params))
    # bf16 MXU inputs (f32 accumulation) over K=16384 -> loosened tolerance.
    err = float(jnp.max(jnp.abs(out - ref)))
    scale = float(jnp.max(jnp.abs(ref)))
    assert err <= 0.05 * scale + 1e-4, (err, scale)

    print("KERNEL_OK")
</pallas_src>

<mosaic_0001>
module attributes {stable_mosaic.version = 11 : i64} {
  func.func @_mlp_kernel(%arg0: i32, %arg1: i32, %arg2: memref<8x2048xf32, #tpu.memory_space<vmem>>, %arg3: memref<2048x256xbf16, #tpu.memory_space<vmem>>, %arg4: memref<1x256xf32, #tpu.memory_space<vmem>>, %arg5: memref<256x128xbf16, #tpu.memory_space<vmem>>, %arg6: memref<1x128xf32, #tpu.memory_space<vmem>>, %arg7: memref<128x128xbf16, #tpu.memory_space<vmem>>, %arg8: memref<1x128xf32, #tpu.memory_space<vmem>>, %arg9: memref<8x128xf32, #tpu.memory_space<vmem>>, %arg10: memref<8x256xf32, #tpu.memory_space<vmem>>) attributes {dimension_semantics = [#tpu.dimension_semantics<parallel>, #tpu.dimension_semantics<arbitrary>], iteration_bounds = array<i64: 1, 8>, scalar_prefetch = 0 : i64, scratch_operands = 1 : i64, tpu.core_type = #tpu.core_type<tc>, window_params = [{transform_indices = @transform_0, window_bounds = array<i64: 8, 2048>}, {transform_indices = @transform_1, window_bounds = array<i64: 2048, 256>}, {pipeline_mode = #tpu.pipeline_mode<synchronous>, transform_indices = @transform_2, window_bounds = array<i64: 1, 256>}, {pipeline_mode = #tpu.pipeline_mode<synchronous>, transform_indices = @transform_3, window_bounds = array<i64: 256, 128>}, {pipeline_mode = #tpu.pipeline_mode<synchronous>, transform_indices = @transform_4, window_bounds = array<i64: 1, 128>}, {pipeline_mode = #tpu.pipeline_mode<synchronous>, transform_indices = @transform_5, window_bounds = array<i64: 128, 128>}, {pipeline_mode = #tpu.pipeline_mode<synchronous>, transform_indices = @transform_6, window_bounds = array<i64: 1, 128>}, {transform_indices = @transform_7, window_bounds = array<i64: 8, 128>}]} {
    %c0_i32 = arith.constant 0 : i32
    %0 = arith.cmpi eq, %arg1, %c0_i32 : i32
    %1 = arith.extui %0 : i1 to i32
    %c0_i32_0 = arith.constant 0 : i32
    %2 = arith.cmpi ne, %1, %c0_i32_0 : i32
    scf.if %2 {
      %cst_9 = arith.constant 0.000000e+00 : f32
      %13 = vector.broadcast %cst_9 : f32 to vector<8x256xf32>
      %c0_10 = arith.constant 0 : index
      %c0_11 = arith.constant 0 : index
      %14 = vector.load %arg10[%c0_10, %c0_11] : memref<8x256xf32, #tpu.memory_space<vmem>>, vector<8x256xf32>
      tpu.vector_store %arg10[%c0_10, %c0_11], %13 {strides = array<i32>} : memref<8x256xf32, #tpu.memory_space<vmem>>, vector<8x256xf32>,
    } else {
    }
    %c0 = arith.constant 0 : index
    %c0_1 = arith.constant 0 : index
    %3 = vector.load %arg10[%c0, %c0_1] : memref<8x256xf32, #tpu.memory_space<vmem>>, vector<8x256xf32>
    %c0_2 = arith.constant 0 : index
    %c0_3 = arith.constant 0 : index
    %4 = vector.load %arg2[%c0_2, %c0_3] : memref<8x2048xf32, #tpu.memory_space<vmem>>, vector<8x2048xf32>
    %5 = arith.truncf %4 : vector<8x2048xf32> to vector<8x2048xbf16>
    %c0_4 = arith.constant 0 : index
    %c0_5 = arith.constant 0 : index
    %6 = vector.load %arg3[%c0_4, %c0_5] : memref<2048x256xbf16, #tpu.memory_space<vmem>>, vector<2048x256xbf16>
    %cst = arith.constant dense<0.000000e+00> : vector<8x256xf32>
    %7 = tpu.matmul %5, %6, %cst {dimension_numbers = #tpu.dot_dimension_numbers<[1], [0], [0], [1], [0, 0, 1, 1], [], []>} : vector<8x2048xbf16>, vector<2048x256xbf16>, vector<8x256xf32> -> vector<8x256xf32>
    %8 = arith.addf %3, %7 : vector<8x256xf32>
    %c0_6 = arith.constant 0 : index
    %c0_7 = arith.constant 0 : index
    %9 = vector.load %arg10[%c0_6, %c0_7] : memref<8x256xf32, #tpu.memory_space<vmem>>, vector<8x256xf32>
    tpu.vector_store %arg10[%c0_6, %c0_7], %8 {strides = array<i32>} : memref<8x256xf32, #tpu.memory_space<vmem>>, vector<8x256xf32>,
    %c7_i32 = arith.constant 7 : i32
    %10 = arith.cmpi eq, %arg1, %c7_i32 : i32
    %11 = arith.extui %10 : i1 to i32
    %c0_i32_8 = arith.constant 0 : i32
    %12 = arith.cmpi ne, %11, %c0_i32_8 : i32
    scf.if %12 {
      %c0_9 = arith.constant 0 : index
      %c0_10 = arith.constant 0 : index
      %13 = vector.load %arg10[%c0_9, %c0_10] : memref<8x256xf32, #tpu.memory_space<vmem>>, vector<8x256xf32>
      %c0_11 = arith.constant 0 : index
      %c0_12 = arith.constant 0 : index
      %14 = vector.load %arg4[%c0_11, %c0_12] : memref<1x256xf32, #tpu.memory_space<vmem>>, vector<1x256xf32>
      %15 = vector.broadcast %14 : vector<1x256xf32> to vector<8x256xf32>
      %16 = arith.addf %13, %15 : vector<8x256xf32>
      %cst_13 = arith.constant 0.000000e+00 : f32
      %17 = vector.broadcast %cst_13 : f32 to vector<8x256xf32>
      %18 = arith.maximumf %16, %17 : vector<8x256xf32>
      %19 = arith.truncf %18 : vector<8x256xf32> to vector<8x256xbf16>
      %c0_14 = arith.constant 0 : index
      %c0_15 = arith.constant 0 : index
      %20 = vector.load %arg5[%c0_14, %c0_15] : memref<256x128xbf16, #tpu.memory_space<vmem>>, vector<256x128xbf16>
      %cst_16 = arith.constant dense<0.000000e+00> : vector<8x128xf32>
      %21 = tpu.matmul %19, %20, %cst_16 {dimension_numbers = #tpu.dot_dimension_numbers<[1], [0], [0], [1], [0, 0, 1, 1], [], []>} : vector<8x256xbf16>, vector<256x128xbf16>, vector<8x128xf32> -> vector<8x128xf32>
      %c0_17 = arith.constant 0 : index
      %c0_18 = arith.constant 0 : index
      %22 = vector.load %arg6[%c0_17, %c0_18] : memref<1x128xf32, #tpu.memory_space<vmem>>, vector<1x128xf32>
      %23 = vector.broadcast %22 : vector<1x128xf32> to vector<8x128xf32>
      %24 = arith.addf %21, %23 : vector<8x128xf32>
      %cst_19 = arith.constant 0.000000e+00 : f32
      %25 = vector.broadcast %cst_19 : f32 to vector<8x128xf32>
      %26 = arith.maximumf %24, %25 : vector<8x128xf32>
      %27 = arith.truncf %26 : vector<8x128xf32> to vector<8x128xbf16>
      %c0_20 = arith.constant 0 : index
      %c0_21 = arith.constant 0 : index
      %28 = vector.load %arg7[%c0_20, %c0_21] : memref<128x128xbf16, #tpu.memory_space<vmem>>, vector<128x128xbf16>
      %cst_22 = arith.constant dense<0.000000e+00> : vector<8x128xf32>
      %29 = tpu.matmul %27, %28, %cst_22 {dimension_numbers = #tpu.dot_dimension_numbers<[1], [0], [0], [1], [0, 0, 1, 1], [], []>} : vector<8x128xbf16>, vector<128x128xbf16>, vector<8x128xf32> -> vector<8x128xf32>
      %c0_23 = arith.constant 0 : index
      %c0_24 = arith.constant 0 : index
      %30 = vector.load %arg8[%c0_23, %c0_24] : memref<1x128xf32, #tpu.memory_space<vmem>>, vector<1x128xf32>
      %31 = vector.broadcast %30 : vector<1x128xf32> to vector<8x128xf32>
      %32 = arith.addf %29, %31 : vector<8x128xf32>
      %c0_25 = arith.constant 0 : index
      %c0_26 = arith.constant 0 : index
      %33 = vector.load %arg9[%c0_25, %c0_26] : memref<8x128xf32, #tpu.memory_space<vmem>>, vector<8x128xf32>
      tpu.vector_store %arg9[%c0_25, %c0_26], %32 {strides = array<i32>} : memref<8x128xf32, #tpu.memory_space<vmem>>, vector<8x128xf32>,
    } else {
    }
    return
  }
  func.func @transform_0(%arg0: i32, %arg1: i32) -> (i32, i32) {
    %c0_i32 = arith.constant 0 : i32
    return %arg0, %arg1 : i32, i32
  }
  func.func @transform_1(%arg0: i32, %arg1: i32) -> (i32, i32) {
    %c0_i32 = arith.constant 0 : i32
    %c0_i32_0 = arith.constant 0 : i32
    return %arg1, %c0_i32 : i32, i32
  }
  func.func @transform_2(%arg0: i32, %arg1: i32) -> (i32, i32) {
    %c0_i32 = arith.constant 0 : i32
    %c0_i32_0 = arith.constant 0 : i32
    %c0_i32_1 = arith.constant 0 : i32
    return %c0_i32, %c0_i32_0 : i32, i32
  }
  func.func @transform_3(%arg0: i32, %arg1: i32) -> (i32, i32) {
    %c0_i32 = arith.constant 0 : i32
    %c0_i32_0 = arith.constant 0 : i32
    %c0_i32_1 = arith.constant 0 : i32
    return %c0_i32, %c0_i32_0 : i32, i32
  }
  func.func @transform_4(%arg0: i32, %arg1: i32) -> (i32, i32) {
    %c0_i32 = arith.constant 0 : i32
    %c0_i32_0 = arith.constant 0 : i32
    %c0_i32_1 = arith.constant 0 : i32
    return %c0_i32, %c0_i32_0 : i32, i32
  }
  func.func @transform_5(%arg0: i32, %arg1: i32) -> (i32, i32) {
    %c0_i32 = arith.constant 0 : i32
    %c0_i32_0 = arith.constant 0 : i32
    %c0_i32_1 = arith.constant 0 : i32
    return %c0_i32, %c0_i32_0 : i32, i32
  }
  func.func @transform_6(%arg0: i32, %arg1: i32) -> (i32, i32) {
    %c0_i32 = arith.constant 0 : i32
    %c0_i32_0 = arith.constant 0 : i32
    %c0_i32_1 = arith.constant 0 : i32
    return %c0_i32, %c0_i32_0 : i32, i32
  }
  func.func @transform_7(%arg0: i32, %arg1: i32) -> (i32, i32) {
    %c0_i32 = arith.constant 0 : i32
    %c0_i32_0 = arith.constant 0 : i32
    return %arg0, %c0_i32 : i32, i32
  }
}

</mosaic_0001>

<llo_original>
// kernel: linear_forward.1
$region0: #{linear_forward.1}
  #allocation0 [shape = 'u32[]', space=smem, size = 0x4, offset = 0x4, fixed_abs, tag = 'smem constant byte address 0x4 - core index']
  #allocation1 [shape = 'u32[72,128]{1,0:T(1,128)}', space=vmem, size = 0x9000, scoped, tag = 'internal scratch']
  #allocation2 [shape = 'f32[8,256]{1,0:T(8,128)}', space=vmem, size = 0x2000, scoped, tag = 'scratch operand']
  %s0 = inlined_call_operand.vmem [shape: f32[2,16384], index: 0, kind: input, shape index: {}]
  %s1 = inlined_call_operand.hbm [shape: bf16[16384,256], index: 1, kind: input, shape index: {}]
  %s2 = inlined_call_operand.hbm [shape: f32[1,256], index: 2, kind: input, shape index: {}]
  %s3 = inlined_call_operand.hbm [shape: bf16[256,128], index: 3, kind: input, shape index: {}]
  %s4 = inlined_call_operand.hbm [shape: f32[1,128], index: 4, kind: input, shape index: {}]
  %s5 = inlined_call_operand.hbm [shape: bf16[128,128], index: 5, kind: input, shape index: {}]
  %s6 = inlined_call_operand.hbm [shape: f32[1,128], index: 6, kind: input, shape index: {}]
  %s7 = inlined_call_operand.hbm [shape: f32[2,128], index: 7, kind: output, shape index: {}]
  %s8 = sld [smem:[#allocation0]]
  $region116: #{linear_forward.1} parent=0
    _
  %s10 = ssub.s32 1, %s8
  %s11 = scalar_select 0, %s10, %s8
  $region1: #{linear_forward.1} parent=0
    #allocation3 [shape = 'u8[131072]{0}', space=vmem, size = 0x20000, scoped, tag = 'input window, operand 0']
    #allocation4 [shape = 'u8[2097152]{0}', space=vmem, size = 0x200000, scoped, tag = 'input window, operand 1']
    #allocation5 [shape = 's32[2]{0}', space=sflag, size = 0x8, scoped, tag = 'scoped memory for linear_forward.1']
    #allocation6 [shape = 's32[2]{0}', space=sflag, size = 0x8, scoped, tag = 'scoped memory for linear_forward.1']
    #allocation7 [shape = 'u8[1024]{0}', space=vmem, size = 0x400, scoped, tag = 'input window, operand 2, single buffered']
    #allocation8 [shape = 's32[1]{0}', space=sflag, size = 0x4, scoped, tag = 'scoped memory for linear_forward.1']
    #allocation9 [shape = 'u8[65536]{0}', space=vmem, size = 0x10000, scoped, tag = 'input window, operand 3, single buffered']
    #allocation10 [shape = 'u8[512]{0}', space=vmem, size = 0x400, scoped, tag = 'input window, operand 4, single buffered']
    #allocation11 [shape = 's32[1]{0}', space=sflag, size = 0x4, scoped, tag = 'scoped memory for linear_forward.1']
    #allocation12 [shape = 'u8[32768]{0}', space=vmem, size = 0x8000, scoped, tag = 'input window, operand 5, single buffered']
    #allocation13 [shape = 'u8[512]{0}', space=vmem, size = 0x400, scoped, tag = 'input window, operand 6, single buffered']
    #allocation14 [shape = 's32[1]{0}', space=sflag, size = 0x4, scoped, tag = 'scoped memory for linear_forward.1']
    #allocation15 [shape = 'u8[4096]{0}', space=vmem, size = 0x1000, scoped, tag = 'output window, operand 0, single buffered']
    %12 = vsyncpa [#allocation5], 0
    %s13 = scalar_lea.sflag [#allocation5], 1
    %14 = vsyncpa %s13, 0
    %15 = vsyncpa [#allocation8], 0
    %16 = vsyncpa [#allocation11], 0
    %17 = vsyncpa [#allocation14], 0
    %18 = vsyncpa [#allocation6], 0
    loop: start=0, step=1, limit=10
    $region2: #{linear_forward.1} parent=1 // loop_pre_header
      _
    $region3: #{linear_forward.1} parent=1 // loop_header
      %s20 = sphi 0, %s24
      %p21 = scmp.ge.s32.totalorder %s20, 10
      %s27 = sphi 0, %s39
      %s28 = sphi 0, %s35
      %s29 = sphi 0, %s27
      %s30 = sphi 0, %s28
      %s31 = sphi 0, %s29
      %s32 = sphi 0, %s30
      %s44 = sphi 0, %s46
      %s47 = sphi 0, %s44
      %s48 = sphi 0, %s47
      %s64 = sphi 0, %s48
      %s70 = sphi 0, %s72
      %s73 = sphi 0, %s70
      %s74 = sphi 0, %s73
      %s90 = sphi 0, %s74
      %s94 = sphi 0, %s94
      %s96 = sphi 0, %s94
      %s97 = sphi 0, %s96
      %s111 = sphi 0, %s97
      %s115 = sphi 0, %s115
      %s117 = sphi 0, %s115
      %s118 = sphi 0, %s117
      %s132 = sphi 0, %s118
      %s136 = sphi 0, %s136
      %s138 = sphi 0, %s136
      %s139 = sphi 0, %s138
      %s153 = sphi 0, %s139
      %s157 = sphi 0, %s157
      %s159 = sphi 0, %s157
      %s160 = sphi 0, %s159
      %s174 = sphi 0, %s160
      %s178 = sphi 0, %s178
      %s180 = sphi 0, %s178
      %s181 = sphi 0, %s180
      %s195 = sphi 0, %s181
      %s201 = sphi 0, %s203
      %s204 = sphi 0, %s201
      %s205 = sphi 0, %s204
      %s221 = sphi 0, %s205
    $region4: #{linear_forward.1} parent=1 // loop_header_branch
      %23 = sbr.rel (%p21) target = $region8
    $region5: #{linear_forward.1} parent=1 // loop_body
      %s25 = ssub.s32 %s20, 1
      %s26 = ssub.s32 %s20, 2
      %s33 = sadd.s32 1, %s28
      %p34 = scmp.ge.s32.totalorder %s33, 8
      %s35 = scalar_select %p34, 0, %s33
      %s36 = sadd.s32 1, %s27
      %s37 = scalar_select %p34, %s36, %s27
      %p38 = scmp.ge.s32.totalorder %s37, 1
      %s39 = scalar_select %p38, 0, %s37
      %s40 = ssub.s32 %s27, %s39
      %s41 = ssub.s32 %s28, %s35
      %s42 = sor.u32 %s40, %s41
      %p43 = scmp.eq.s32.totalorder %s42, 0
      %s45 = sadd.s32 %s44, 1
      %s46 = scalar_select %p43, %s44, %s45
      %p49 = pneg %p43
      %p50 = scmp.eq.s32.totalorder %s20, 7
      %p51 = por %p49, %p50
      %p52 = scmp.ne.s32.totalorder %s44, %s47
      %p53 = scmp.eq.s32.totalorder %s20, 0
      %p54 = por %p52, %p53
      %p55 = scmp.ne.s32.totalorder %s44, %s47
      %p56 = scmp.eq.s32.totalorder %s25, 7
      %p57 = por %p55, %p56
      %p58 = scmp.ne.s32.totalorder %s47, %s48
      %p59 = scmp.eq.s32.totalorder %s25, 0
      %p60 = por %p58, %p59
      %p61 = scmp.ne.s32.totalorder %s47, %s48
      %p62 = scmp.eq.s32.totalorder %s26, 7
      %p63 = por %p61, %p62
      %p65 = scmp.ne.s32.totalorder %s48, %s64
      %p66 = scmp.eq.s32.totalorder %s26, 0
      %p67 = por %p65, %p66
      %s68 = ssub.s32 %s28, %s35
      %p69 = scmp.eq.s32.totalorder %s68, 0
      %s71 = sadd.s32 %s70, 1
      %s72 = scalar_select %p69, %s70, %s71
      %p75 = pneg %p69
      %p76 = scmp.eq.s32.totalorder %s20, 7
      %p77 = por %p75, %p76
      %p78 = scmp.ne.s32.totalorder %s70, %s73
      %p79 = scmp.eq.s32.totalorder %s20, 0
      %p80 = por %p78, %p79
      %p81 = scmp.ne.s32.totalorder %s70, %s73
      %p82 = scmp.eq.s32.totalorder %s25, 7
      %p83 = por %p81, %p82
      %p84 = scmp.ne.s32.totalorder %s73, %s74
      %p85 = scmp.eq.s32.totalorder %s25, 0
      %p86 = por %p84, %p85
      %p87 = scmp.ne.s32.totalorder %s73, %s74
      %p88 = scmp.eq.s32.totalorder %s26, 7
      %p89 = por %p87, %p88
      %p91 = scmp.ne.s32.totalorder %s74, %s90
      %p92 = scmp.eq.s32.totalorder %s26, 0
      %p93 = por %p91, %p92
      %s95 = sadd.s32 %s94, 1
      %p98 = scmp.eq.s32.totalorder %s20, 7
      %p99 = scmp.ne.s32.totalorder %s94, %s96
      %p100 = scmp.eq.s32.totalorder %s20, 0
      %p101 = por %p99, %p100
      %p102 = scmp.ne.s32.totalorder %s94, %s96
      %p103 = scmp.eq.s32.totalorder %s25, 7
      %p104 = por %p102, %p103
      %p105 = scmp.ne.s32.totalorder %s96, %s97
      %p106 = scmp.eq.s32.totalorder %s25, 0
      %p107 = por %p105, %p106
      %p108 = scmp.ne.s32.totalorder %s96, %s97
      %p109 = scmp.eq.s32.totalorder %s26, 7
      %p110 = por %p108, %p109
      %p112 = scmp.ne.s32.totalorder %s97, %s111
      %p113 = scmp.eq.s32.totalorder %s26, 0
      %p114 = por %p112, %p113
      %s116 = sadd.s32 %s115, 1
      %p119 = scmp.eq.s32.totalorder %s20, 7
      %p120 = scmp.ne.s32.totalorder %s115, %s117
      %p121 = scmp.eq.s32.totalorder %s20, 0
      %p122 = por %p120, %p121
      %p123 = scmp.ne.s32.totalorder %s115, %s117
      %p124 = scmp.eq.s32.totalorder %s25, 7
      %p125 = por %p123, %p124
      %p126 = scmp.ne.s32.totalorder %s117, %s118
      %p127 = scmp.eq.s32.totalorder %s25, 0
      %p128 = por %p126, %p127
      %p129 = scmp.ne.s32.totalorder %s117, %s118
      %p130 = scmp.eq.s32.totalorder %s26, 7
      %p131 = por %p129, %p130
      %p133 = scmp.ne.s32.totalorder %s118, %s132
      %p134 = scmp.eq.s32.totalorder %s26, 0
      %p135 = por %p133, %p134
      %s137 = sadd.s32 %s136, 1
      %p140 = scmp.eq.s32.totalorder %s20, 7
      %p141 = scmp.ne.s32.totalorder %s136, %s138
      %p142 = scmp.eq.s32.totalorder %s20, 0
      %p143 = por %p141, %p142
      %p144 = scmp.ne.s32.totalorder %s136, %s138
      %p145 = scmp.eq.s32.totalorder %s25, 7
      %p146 = por %p144, %p145
      %p147 = scmp.ne.s32.totalorder %s138, %s139
      %p148 = scmp.eq.s32.totalorder %s25, 0
      %p149 = por %p147, %p148
      %p150 = scmp.ne.s32.totalorder %s138, %s139
      %p151 = scmp.eq.s32.totalorder %s26, 7
      %p152 = por %p150, %p151
      %p154 = scmp.ne.s32.totalorder %s139, %s153
      %p155 = scmp.eq.s32.totalorder %s26, 0
      %p156 = por %p154, %p155
      %s158 = sadd.s32 %s157, 1
      %p161 = scmp.eq.s32.totalorder %s20, 7
      %p162 = scmp.ne.s32.totalorder %s157, %s159
      %p163 = scmp.eq.s32.totalorder %s20, 0
      %p164 = por %p162, %p163
      %p165 = scmp.ne.s32.totalorder %s157, %s159
      %p166 = scmp.eq.s32.totalorder %s25, 7
      %p167 = por %p165, %p166
      %p168 = scmp.ne.s32.totalorder %s159, %s160
      %p169 = scmp.eq.s32.totalorder %s25, 0
      %p170 = por %p168, %p169
      %p171 = scmp.ne.s32.totalorder %s159, %s160
      %p172 = scmp.eq.s32.totalorder %s26, 7
      %p173 = por %p171, %p172
      %p175 = scmp.ne.s32.totalorder %s160, %s174
      %p176 = scmp.eq.s32.totalorder %s26, 0
      %p177 = por %p175, %p176
      %s179 = sadd.s32 %s178, 1
      %p182 = scmp.eq.s32.totalorder %s20, 7
      %p183 = scmp.ne.s32.totalorder %s178, %s180
      %p184 = scmp.eq.s32.totalorder %s20, 0
      %p185 = por %p183, %p184
      %p186 = scmp.ne.s32.totalorder %s178, %s180
      %p187 = scmp.eq.s32.totalorder %s25, 7
      %p188 = por %p186, %p187
      %p189 = scmp.ne.s32.totalorder %s180, %s181
      %p190 = scmp.eq.s32.totalorder %s25, 0
      %p191 = por %p189, %p190
      %p192 = scmp.ne.s32.totalorder %s180, %s181
      %p193 = scmp.eq.s32.totalorder %s26, 7
      %p194 = por %p192, %p193
      %p196 = scmp.ne.s32.totalorder %s181, %s195
      %p197 = scmp.eq.s32.totalorder %s26, 0
      %p198 = por %p196, %p197
      %s199 = ssub.s32 %s27, %s39
      %p200 = scmp.eq.s32.totalorder %s199, 0
      %s202 = sadd.s32 %s201, 1
      %s203 = scalar_select %p200, %s201, %s202
      %p206 = pneg %p200
      %p207 = scmp.eq.s32.totalorder %s20, 7
      %p208 = por %p206, %p207
      %p209 = scmp.ne.s32.totalorder %s201, %s204
      %p210 = scmp.eq.s32.totalorder %s20, 0
      %p211 = por %p209, %p210
      %p212 = scmp.ne.s32.totalorder %s201, %s204
      %p213 = scmp.eq.s32.totalorder %s25, 7
      %p214 = por %p212, %p213
      %p215 = scmp.ne.s32.totalorder %s204, %s205
      %p216 = scmp.eq.s32.totalorder %s25, 0
      %p217 = por %p215, %p216
      %p218 = scmp.ne.s32.totalorder %s204, %s205
      %p219 = scmp.eq.s32.totalorder %s26, 7
      %p220 = por %p218, %p219
      %p222 = scmp.ne.s32.totalorder %s205, %s221
      %p223 = scmp.eq.s32.totalorder %s26, 0
      %p224 = por %p222, %p223
      %p225 = scmp.le.s32.totalorder 1, %s20
      %p226 = scmp.lt.s32.totalorder %s20, 9
      %p227 = pnand %p225, %p226
      %p228 = pneg %p227
      // Predicated region
      $region9: #{linear_forward.1} parent=5 // pred_check
        _
      $region10: #{linear_forward.1} parent=5 // pred_check_branch
        %230 = sbr.rel (%p227) target = $region12
      $region11: #{linear_forward.1} parent=5 // pred_region
        %s231 = ssub.s32 %s20, 1
        // Predicated region
        $region13: #{linear_forward.1} parent=11 // pred_check
          %p232 = pneg %p107
        $region14: #{linear_forward.1} parent=11 // pred_check_branch
          %234 = sbr.rel (%p232) target = $region16
        $region15: #{linear_forward.1} parent=11 // pred_region
          %236 = vsyncadd [#allocation8], 0
          %s238 = sshll.u32 %s2, 4
          %s239 = int_to_ptr.hbm [resolvable:$true] %s238
          %s240 = sshll.u32 [#allocation7], 4
          %s241 = int_to_ptr.vmem [resolvable:$true] %s240
          %243 = dma.hbm_to_vmem [thread:$0]  %s239, 32, %s241, [#allocation8]
        $region16: #{linear_forward.1} parent=11 // pred_fallthru
          _
        // Predicated region
        $region17: #{linear_forward.1} parent=11 // pred_check
          %p244 = pneg %p128
        $region18: #{linear_forward.1} parent=11 // pred_check_branch
          %246 = sbr.rel (%p244) target = $region20
        $region19: #{linear_forward.1} parent=11 // pred_region
          %248 = vsyncadd [#allocation8], 0
          %s249 = sshll.u32 %s3, 4
          %s250 = int_to_ptr.hbm [resolvable:$true] %s249
          %s251 = sshll.u32 [#allocation9], 4
          %s252 = int_to_ptr.vmem [resolvable:$true] %s251
          %257 = dma.hbm_to_vmem [thread:$0]  %s250, 2048, %s252, [#allocation8], 64, 64, 4
        $region20: #{linear_forward.1} parent=11 // pred_fallthru
          _
        // Predicated region
        $region21: #{linear_forward.1} parent=11 // pred_check
          %p258 = pneg %p149
        $region22: #{linear_forward.1} parent=11 // pred_check_branch
          %260 = sbr.rel (%p258) target = $region24
        $region23: #{linear_forward.1} parent=11 // pred_region
          %262 = vsyncadd [#allocation11], 0
          %s264 = sshll.u32 %s4, 4
          %s265 = int_to_ptr.hbm [resolvable:$true] %s264
          %s266 = sshll.u32 [#allocation10], 4
          %s267 = int_to_ptr.vmem [resolvable:$true] %s266
          %269 = dma.hbm_to_vmem [thread:$0]  %s265, 16, %s267, [#allocation11]
        $region24: #{linear_forward.1} parent=11 // pred_fallthru
          _
        // Predicated region
        $region25: #{linear_forward.1} parent=11 // pred_check
          %p270 = pneg %p170
        $region26: #{linear_forward.1} parent=11 // pred_check_branch
          %272 = sbr.rel (%p270) target = $region28
        $region27: #{linear_forward.1} parent=11 // pred_region
          %274 = vsyncadd [#allocation11], 0
          %s275 = sshll.u32 %s5, 4
          %s276 = int_to_ptr.hbm [resolvable:$true] %s275
          %s277 = sshll.u32 [#allocation12], 4
          %s278 = int_to_ptr.vmem [resolvable:$true] %s277
          %283 = dma.hbm_to_vmem [thread:$0]  %s276, 1024, %s278, [#allocation11], 64, 64, 4
        $region28: #{linear_forward.1} parent=11 // pred_fallthru
          _
        // Predicated region
        $region29: #{linear_forward.1} parent=11 // pred_check
          %p284 = pneg %p191
        $region30: #{linear_forward.1} parent=11 // pred_check_branch
          %286 = sbr.rel (%p284) target = $region32
        $region31: #{linear_forward.1} parent=11 // pred_region
          %288 = vsyncadd [#allocation14], 0
          %s290 = sshll.u32 %s6, 4
          %s291 = int_to_ptr.hbm [resolvable:$true] %s290
          %s292 = sshll.u32 [#allocation13], 4
          %s293 = int_to_ptr.vmem [resolvable:$true] %s292
          %295 = dma.hbm_to_vmem [thread:$0]  %s291, 16, %s293, [#allocation14]
        $region32: #{linear_forward.1} parent=11 // pred_fallthru
          _
      $region12: #{linear_forward.1} parent=5 // pred_fallthru
        _
      %p296 = scmp.lt.s32.totalorder %s20, 8
      // Predicated region
      $region33: #{linear_forward.1} parent=5 // pred_check
        %p297 = pneg %p296
      $region34: #{linear_forward.1} parent=5 // pred_check_branch
        %299 = sbr.rel (%p297) target = $region36
      $region35: #{linear_forward.1} parent=5 // pred_region
        // Predicated region
        $region37: #{linear_forward.1} parent=35 // pred_check
          %p300 = pneg %p54
        $region38: #{linear_forward.1} parent=35 // pred_check_branch
          %302 = sbr.rel (%p300) target = $region40
        $region39: #{linear_forward.1} parent=35 // pred_region
          %s303 = sand.u32 %s44, 1
          %s304 = sand.u32 %s44, 1
          %s305 = smul.addr %s304, 128
          %s306 = scalar_lea.vmem [#allocation3], %s305
          %s307 = smul.u32 4, %s27
          %s308 = smul.u32 16, %s28
          %s309 = ssub.s32 1, %s307
          %s310 = smul.u32 2, %s309
          %s311 = smul.u32 %s310, 16
          %p312 = scmp.ne.s32.totalorder 0, %s311
          %s313 = smul.addr %s307, 128
          %s314 = sadd.s32 %s308, %s313
          %s315 = smul.addr %s314, 2
          %s316 = scalar_lea.vmem %s0, %s315
          // Predicated region
          $region41: #{linear_forward.1} parent=39 // pred_check
            %p317 = pneg %p312
          $region42: #{linear_forward.1} parent=39 // pred_check_branch
            %319 = sbr.rel (%p317) target = $region44
          $region43: #{linear_forward.1} parent=39 // pred_region
            // Predicated region
            $region45: #{linear_forward.1} parent=43 // pred_check
              _
            $region46: #{linear_forward.1} parent=43 // pred_check_branch
              %321 = sbr.rel (0) target = $region48
            $region47: #{linear_forward.1} parent=43 // pred_region
              // While loop
              $region49: #{linear_forward.1} parent=47 // loop_pre_header
                _
              $region50: #{linear_forward.1} parent=47 // loop_header
                %s323 = sphi 0, %s325
                %p324 = scmp.ge.s32.totalorder %s323, %s309
                %s328 = sphi 0, %s341
                %s329 = sphi %s316, %s344
                %s330 = sphi %s306, %s345
              $region51: #{linear_forward.1} parent=47 // loop_header_branch
                %327 = sbr.rel (%p324) target = $region55
              $region52: #{linear_forward.1} parent=47 // loop_body
                %v331 = vld [vmem:[%s329] sm:$0xff]
                %332 = vst [vmem:[%s330] sm:$0xff] %v331
                %v333 = vld [vmem:[%s329 + $0x8] sm:$0xff]
                %334 = vst [vmem:[%s330 + $0x8] sm:$0xff] %v333
                %v335 = vld [vmem:[%s329 + $0x10] sm:$0xff]
                %336 = vst [vmem:[%s330 + $0x10] sm:$0xff] %v335
                %v337 = vld [vmem:[%s329 + $0x18] sm:$0xff]
                %338 = vst [vmem:[%s330 + $0x18] sm:$0xff] %v337
                %s339 = sadd.s32 1, %s328
                %p340 = scmp.ge.s32.totalorder %s339, %s309
                %s341 = scalar_select %p340, 0, %s339
                %s342 = smul.u32 %s341, 256
                %s343 = smul.u32 %s341, 32
                %s344 = scalar_lea.vmem %s316, %s342
                %s345 = scalar_lea.vmem %s306, %s343 [#allocation3]
              $region53: #{linear_forward.1} parent=47 // loop_footer
                %s325 = sadd.s32 %s323, 1
              $region54: #{linear_forward.1} parent=47 // loop_footer_branch
                %322 = sbr.rel target = $region50
              $region55: #{linear_forward.1} parent=47 // loop_exit
                _
            $region48: #{linear_forward.1} parent=43 // pred_fallthru
              _
            // Predicated region
            $region56: #{linear_forward.1} parent=43 // pred_check
              _
            $region57: #{linear_forward.1} parent=43 // pred_check_branch
              %347 = sbr.rel target = $region59
            $region58: #{linear_forward.1} parent=43 // pred_region
              _
            $region59: #{linear_forward.1} parent=43 // pred_fallthru
              _
          $region44: #{linear_forward.1} parent=39 // pred_fallthru
            _
          %348 = vnop
        $region40: #{linear_forward.1} parent=35 // pred_fallthru
          _
        // Predicated region
        $region60: #{linear_forward.1} parent=35 // pred_check
          %p349 = pneg %p80
        $region61: #{linear_forward.1} parent=35 // pred_check_branch
          %351 = sbr.rel (%p349) target = $region63
        $region62: #{linear_forward.1} parent=35 // pred_region
          %s352 = sand.u32 %s70, 1
          %s353 = scalar_lea.sflag [#allocation5], %s352
          %s354 = sand.u32 %s70, 1
          %s355 = smul.addr %s354, 2048
          %s356 = scalar_lea.vmem [#allocation4], %s355
          %s357 = smul.u32 256, %s28
          %359 = vsyncadd %s353, 0
          %s360 = smul.addr %s357, 2
          %s361 = smul.addr %s360, 4
          %s362 = scalar_lea.hbm %s1, %s361
          %s363 = sshll.u32 %s362, 4
          %s364 = int_to_ptr.hbm [resolvable:$true] %s363
          %s365 = sshll.u32 %s356, 4
          %s366 = int_to_ptr.vmem [resolvable:$true] %s365
          %371 = dma.hbm_to_vmem [thread:$0]  %s364, 32768, %s366, %s353, 128, 128, 8
        $region63: #{linear_forward.1} parent=35 // pred_fallthru
          _
      $region36: #{linear_forward.1} parent=5 // pred_fallthru
        _
      %p372 = scmp.le.s32.totalorder 1, %s20
      %p373 = scmp.lt.s32.totalorder %s20, 9
      %p374 = pnand %p372, %p373
      %p375 = pneg %p374
      // Predicated region
      $region64: #{linear_forward.1} parent=5 // pred_check
        _
      $region65: #{linear_forward.1} parent=5 // pred_check_branch
        %377 = sbr.rel (%p374) target = $region67
      $region66: #{linear_forward.1} parent=5 // pred_region
        %s378 = ssub.s32 %s20, 1
        %s379 = sand.u32 %s47, 1
        %s380 = sand.u32 %s47, 1
        %s381 = smul.addr %s380, 128
        %s382 = scalar_lea.vmem [#allocation3], %s381
        // Predicated region
        $region68: #{linear_forward.1} parent=66 // pred_check
          %p383 = pneg %p60
        $region69: #{linear_forward.1} parent=66 // pred_check_branch
          %385 = sbr.rel (%p383) target = $region71
        $region70: #{linear_forward.1} parent=66 // pred_region
          _
        $region71: #{linear_forward.1} parent=66 // pred_fallthru
          _
        %s386 = sand.u32 %s73, 1
        %s387 = scalar_lea.sflag [#allocation5], %s386
        %s388 = sand.u32 %s73, 1
        %s389 = smul.addr %s388, 2048
        %s390 = scalar_lea.vmem [#allocation4], %s389
        // Predicated region
        $region72: #{linear_forward.1} parent=66 // pred_check
          %p391 = pneg %p86
        $region73: #{linear_forward.1} parent=66 // pred_check_branch
          %393 = sbr.rel (%p391) target = $region75
        $region74: #{linear_forward.1} parent=66 // pred_region
          %395 = dma.done %s387, 32768
        $region75: #{linear_forward.1} parent=66 // pred_fallthru
          _
        // Predicated region
        $region76: #{linear_forward.1} parent=66 // pred_check
          %p396 = pneg %p107
        $region77: #{linear_forward.1} parent=66 // pred_check_branch
          %398 = sbr.rel (%p396) target = $region79
        $region78: #{linear_forward.1} parent=66 // pred_region
          %400 = dma.done [#allocation8], 32
        $region79: #{linear_forward.1} parent=66 // pred_fallthru
          _
        // Predicated region
        $region80: #{linear_forward.1} parent=66 // pred_check
          %p401 = pneg %p128
        $region81: #{linear_forward.1} parent=66 // pred_check_branch
          %403 = sbr.rel (%p401) target = $region83
        $region82: #{linear_forward.1} parent=66 // pred_region
          %405 = dma.done [#allocation8], 2048
        $region83: #{linear_forward.1} parent=66 // pred_fallthru
          _
        // Predicated region
        $region84: #{linear_forward.1} parent=66 // pred_check
          %p406 = pneg %p149
        $region85: #{linear_forward.1} parent=66 // pred_check_branch
          %408 = sbr.rel (%p406) target = $region87
        $region86: #{linear_forward.1} parent=66 // pred_region
          %410 = dma.done [#allocation11], 16
        $region87: #{linear_forward.1} parent=66 // pred_fallthru
          _
        // Predicated region
        $region88: #{linear_forward.1} parent=66 // pred_check
          %p411 = pneg %p170
        $region89: #{linear_forward.1} parent=66 // pred_check_branch
          %413 = sbr.rel (%p411) target = $region91
        $region90: #{linear_forward.1} parent=66 // pred_region
          %415 = dma.done [#allocation11], 1024
        $region91: #{linear_forward.1} parent=66 // pred_fallthru
          _
        // Predicated region
        $region92: #{linear_forward.1} parent=66 // pred_check
          %p416 = pneg %p191
        $region93: #{linear_forward.1} parent=66 // pred_check_branch
          %418 = sbr.rel (%p416) target = $region95
        $region94: #{linear_forward.1} parent=66 // pred_region
          %420 = dma.done [#allocation14], 16
        $region95: #{linear_forward.1} parent=66 // pred_fallthru
          _
        %s421 = sand.u32 %s47, 1
        %s422 = sand.u32 %s47, 1
        %s423 = smul.addr %s422, 128
        %s424 = scalar_lea.vmem [#allocation3], %s423
        %p425 = pneg %p60
        %p426 = pneg %p57
        %s427 = sand.u32 %s73, 1
        %s428 = scalar_lea.sflag [#allocation5], %s427
        %s429 = sand.u32 %s73, 1
        %s430 = smul.addr %s429, 2048
        %s431 = scalar_lea.vmem [#allocation4], %s430
        %p432 = pneg %p86
        %p433 = pneg %p83
        %p434 = pneg %p107
        %p435 = pneg %p104
        %p436 = pneg %p128
        %p437 = pneg %p125
        %p438 = pneg %p149
        %p439 = pneg %p146
        %p440 = pneg %p170
        %p441 = pneg %p167
        %p442 = pneg %p191
        %p443 = pneg %p188
        %p444 = pneg %p217
        %p445 = pneg %p214
        %s446 = smul.u32 4, %s29
        %s447 = smul.u32 16, %s30
        %s448 = ssub.s32 1, %s446
        %s449 = smul.u32 2, %s448
        %s450 = smul.u32 %s449, 16
        %s451 = smul.u32 256, %s30
        %s452 = smul.u32 4, %s29
        %s453 = ssub.s32 1, %s452
        %s454 = smul.u32 2, %s453
        %p455 = scmp.eq.s32.totalorder %s30, 0
        // Predicated region
        $region96: #{linear_forward.1} parent=66 // pred_check
          %p456 = pneg %p455
        $region97: #{linear_forward.1} parent=66 // pred_check_branch
          %458 = sbr.rel (%p456) target = $region99
        $region98: #{linear_forward.1} parent=66 // pred_region
          %459 = vst [vmem:[#allocation2] sm:$0xff] 0.0
          %460 = vst [vmem:[#allocation2 + $0x8] sm:$0xff] 0.0
        $region99: #{linear_forward.1} parent=66 // pred_fallthru
          _
        %v461 = vld [vmem:[#allocation2] sm:$0xff]
        %v462 = vld [vmem:[#allocation2 + $0x8] sm:$0xff]
        %v463 = vld [vmem:[%s382] sm:$0xff]
        %v464 = vld [vmem:[%s382 + $0x8] sm:$0xff]
        %v465 = vld [vmem:[%s382 + $0x10] sm:$0xff]
        %v466 = vld [vmem:[%s382 + $0x18] sm:$0xff]
        %v467 = vld [vmem:[%s382 + $0x20] sm:$0xff]
        %v468 = vld [vmem:[%s382 + $0x28] sm:$0xff]
        %v469 = vld [vmem:[%s382 + $0x30] sm:$0xff]
        %v470 = vld [vmem:[%s382 + $0x38] sm:$0xff]
        %v471 = vld [vmem:[%s382 + $0x40] sm:$0xff]
        %v472 = vld [vmem:[%s382 + $0x48] sm:$0xff]
        %v473 = vld [vmem:[%s382 + $0x50] sm:$0xff]
        %v474 = vld [vmem:[%s382 + $0x58] sm:$0xff]
        %v475 = vld [vmem:[%s382 + $0x60] sm:$0xff]
        %v476 = vld [vmem:[%s382 + $0x68] sm:$0xff]
        %v477 = vld [vmem:[%s382 + $0x70] sm:$0xff]
        %v478 = vld [vmem:[%s382 + $0x78] sm:$0xff]
        %495 = vst [vmem:[#allocation1] ss:$4 sm:$0xff] %v463
        %s496 = scalar_lea.vmem [#allocation1], 1
        %497 = vst [vmem:[%s496] ss:$4 sm:$0xff] %v467
        %s498 = scalar_lea.vmem [#allocation1], 2
        %499 = vst [vmem:[%s498] ss:$4 sm:$0xff] %v471
        %s500 = scalar_lea.vmem [#allocation1], 3
        %501 = vst [vmem:[%s500] ss:$4 sm:$0xff] %v475
        %s502 = scalar_lea.vmem [#allocation1], 32
        %503 = vst [vmem:[%s502] ss:$4 sm:$0xff] %v464
        %s504 = scalar_lea.vmem [#allocation1], 33
        %505 = vst [vmem:[%s504] ss:$4 sm:$0xff] %v468
        %s506 = scalar_lea.vmem [#allocation1], 34
        %507 = vst [vmem:[%s506] ss:$4 sm:$0xff] %v472
        %s508 = scalar_lea.vmem [#allocation1], 35
        %509 = vst [vmem:[%s508] ss:$4 sm:$0xff] %v476
        %v510 = vld.sshfl [vmem:[#allocation1] sm:$0xff pattern:$0x73625140]
        %v511 = vld.sshfl [vmem:[#allocation1 + $0x8] sm:$0xff pattern:$0x73625140]
        %v512 = vld.sshfl [vmem:[#allocation1 + $0x10] sm:$0xff pattern:$0x73625140]
        %v513 = vld.sshfl [vmem:[#allocation1 + $0x18] sm:$0xff pattern:$0x73625140]
        %v514 = vld.sshfl [vmem:[#allocation1 + $0x20] sm:$0xff pattern:$0x73625140]
        %v515 = vld.sshfl [vmem:[#allocation1 + $0x28] sm:$0xff pattern:$0x73625140]
        %v516 = vld.sshfl [vmem:[#allocation1 + $0x30] sm:$0xff pattern:$0x73625140]
        %v517 = vld.sshfl [vmem:[#allocation1 + $0x38] sm:$0xff pattern:$0x73625140]
        %518 = vst [vmem:[#allocation1] ss:$4 sm:$0xff] %v465
        %519 = vst [vmem:[%s496] ss:$4 sm:$0xff] %v469
        %520 = vst [vmem:[%s498] ss:$4 sm:$0xff] %v473
        %521 = vst [vmem:[%s500] ss:$4 sm:$0xff] %v477
        %522 = vst [vmem:[%s502] ss:$4 sm:$0xff] %v466
        %523 = vst [vmem:[%s504] ss:$4 sm:$0xff] %v470
        %524 = vst [vmem:[%s506] ss:$4 sm:$0xff] %v474
        %525 = vst [vmem:[%s508] ss:$4 sm:$0xff] %v478
        %v526 = vld.sshfl [vmem:[#allocation1] sm:$0xff pattern:$0x73625140]
        %v527 = vld.sshfl [vmem:[#allocation1 + $0x8] sm:$0xff pattern:$0x73625140]
        %v528 = vld.sshfl [vmem:[#allocation1 + $0x10] sm:$0xff pattern:$0x73625140]
        %v529 = vld.sshfl [vmem:[#allocation1 + $0x18] sm:$0xff pattern:$0x73625140]
        %v530 = vld.sshfl [vmem:[#allocation1 + $0x20] sm:$0xff pattern:$0x73625140]
        %v531 = vld.sshfl [vmem:[#allocation1 + $0x28] sm:$0xff pattern:$0x73625140]
        %v532 = vld.sshfl [vmem:[#allocation1 + $0x30] sm:$0xff pattern:$0x73625140]
        %v533 = vld.sshfl [vmem:[#allocation1 + $0x38] sm:$0xff pattern:$0x73625140]
        %v550 = vpack.c.bf16 %v510, %v510
        %v551 = vpack.c.bf16 %v511, %v511
        %v552 = vpack.c.bf16 %v512, %v512
        %v553 = vpack.c.bf16 %v513, %v513
        %v554 = vpack.c.bf16 %v514, %v514
        %v555 = vpack.c.bf16 %v515, %v515
        %v556 = vpack.c.bf16 %v516, %v516
        %v557 = vpack.c.bf16 %v517, %v517
        %v558 = vpack.c.bf16 %v526, %v526
        %v559 = vpack.c.bf16 %v527, %v527
        %v560 = vpack.c.bf16 %v528, %v528
        %v561 = vpack.c.bf16 %v529, %v529
        %v562 = vpack.c.bf16 %v530, %v530
        %v563 = vpack.c.bf16 %v531, %v531
        %v564 = vpack.c.bf16 %v532, %v532
        %v565 = vpack.c.bf16 %v533, %v533
        %v566 = vld [vmem:[%s390] sm:$0xff]
        %v567 = vld [vmem:[%s390 + $0x8] sm:$0xff]
        %v568 = vld [vmem:[%s390 + $0x10] sm:$0xff]
        %v569 = vld [vmem:[%s390 + $0x18] sm:$0xff]
        %v570 = vld [vmem:[%s390 + $0x20] sm:$0xff]
        %v571 = vld [vmem:[%s390 + $0x28] sm:$0xff]
        %v572 = vld [vmem:[%s390 + $0x30] sm:$0xff]
        %v573 = vld [vmem:[%s390 + $0x38] sm:$0xff]
        %v574 = vld [vmem:[%s390 + $0x40] sm:$0xff]
        %v575 = vld [vmem:[%s390 + $0x48] sm:$0xff]
        %v576 = vld [vmem:[%s390 + $0x50] sm:$0xff]
        %v577 = vld [vmem:[%s390 + $0x58] sm:$0xff]
        %v578 = vld [vmem:[%s390 + $0x60] sm:$0xff]
        %v579 = vld [vmem:[%s390 + $0x68] sm:$0xff]
        %v580 = vld [vmem:[%s390 + $0x70] sm:$0xff]
        %v581 = vld [vmem:[%s390 + $0x78] sm:$0xff]
        %v582 = vld [vmem:[%s390 + $0x80] sm:$0xff]
        %v583 = vld [vmem:[%s390 + $0x88] sm:$0xff]
        %v584 = vld [vmem:[%s390 + $0x90] sm:$0xff]
        %v585 = vld [vmem:[%s390 + $0x98] sm:$0xff]
        %v586 = vld [vmem:[%s390 + $0xa0] sm:$0xff]
        %v587 = vld [vmem:[%s390 + $0xa8] sm:$0xff]
        %v588 = vld [vmem:[%s390 + $0xb0] sm:$0xff]
        %v589 = vld [vmem:[%s390 + $0xb8] sm:$0xff]
        %v590 = vld [vmem:[%s390 + $0xc0] sm:$0xff]
        %v591 = vld [vmem:[%s390 + $0xc8] sm:$0xff]
        %v592 = vld [vmem:[%s390 + $0xd0] sm:$0xff]
        %v593 = vld [vmem:[%s390 + $0xd8] sm:$0xff]
        %v594 = vld [vmem:[%s390 + $0xe0] sm:$0xff]
        %v595 = vld [vmem:[%s390 + $0xe8] sm:$0xff]
        %v596 = vld [vmem:[%s390 + $0xf0] sm:$0xff]
        %v597 = vld [vmem:[%s390 + $0xf8] sm:$0xff]
        %v598 = vld [vmem:[%s390 + $0x100] sm:$0xff]
        %v599 = vld [vmem:[%s390 + $0x108] sm:$0xff]
        %v600 = vld [vmem:[%s390 + $0x110] sm:$0xff]
        %v601 = vld [vmem:[%s390 + $0x118] sm:$0xff]
        %v602 = vld [vmem:[%s390 + $0x120] sm:$0xff]
        %v603 = vld [vmem:[%s390 + $0x128] sm:$0xff]
        %v604 = vld [vmem:[%s390 + $0x130] sm:$0xff]
        %v605 = vld [vmem:[%s390 + $0x138] sm:$0xff]
        %v606 = vld [vmem:[%s390 + $0x140] sm:$0xff]
        %v607 = vld [vmem:[%s390 + $0x148] sm:$0xff]
        %v608 = vld [vmem:[%s390 + $0x150] sm:$0xff]
        %v609 = vld [vmem:[%s390 + $0x158] sm:$0xff]
        %v610 = vld [vmem:[%s390 + $0x160] sm:$0xff]
        %v611 = vld [vmem:[%s390 + $0x168] sm:$0xff]
        %v612 = vld [vmem:[%s390 + $0x170] sm:$0xff]
        %v613 = vld [vmem:[%s390 + $0x178] sm:$0xff]
        %v614 = vld [vmem:[%s390 + $0x180] sm:$0xff]
        %v615 = vld [vmem:[%s390 + $0x188] sm:$0xff]
        %v616 = vld [vmem:[%s390 + $0x190] sm:$0xff]
        %v617 = vld [vmem:[%s390 + $0x198] sm:$0xff]
        %v618 = vld [vmem:[%s390 + $0x1a0] sm:$0xff]
        %v619 = vld [vmem:[%s390 + $0x1a8] sm:$0xff]
        %v620 = vld [vmem:[%s390 + $0x1b0] sm:$0xff]
        %v621 = vld [vmem:[%s390 + $0x1b8] sm:$0xff]
        %v622 = vld [vmem:[%s390 + $0x1c0] sm:$0xff]
        %v623 = vld [vmem:[%s390 + $0x1c8] sm:$0xff]
        %v624 = vld [vmem:[%s390 + $0x1d0] sm:$0xff]
        %v625 = vld [vmem:[%s390 + $0x1d8] sm:$0xff]
        %v626 = vld [vmem:[%s390 + $0x1e0] sm:$0xff]
        %v627 = vld [vmem:[%s390 + $0x1e8] sm:$0xff]
        %v628 = vld [vmem:[%s390 + $0x1f0] sm:$0xff]
        %v629 = vld [vmem:[%s390 + $0x1f8] sm:$0xff]
        %v630 = vld [vmem:[%s390 + $0x200] sm:$0xff]
        %v631 = vld [vmem:[%s390 + $0x208] sm:$0xff]
        %v632 = vld [vmem:[%s390 + $0x210] sm:$0xff]
        %v633 = vld [vmem:[%s390 + $0x218] sm:$0xff]
        %v634 = vld [vmem:[%s390 + $0x220] sm:$0xff]
        %v635 = vld [vmem:[%s390 + $0x228] sm:$0xff]
        %v636 = vld [vmem:[%s390 + $0x230] sm:$0xff]
        %v637 = vld [vmem:[%s390 + $0x238] sm:$0xff]
        %v638 = vld [vmem:[%s390 + $0x240] sm:$0xff]
        %v639 = vld [vmem:[%s390 + $0x248] sm:$0xff]
        %v640 = vld [vmem:[%s390 + $0x250] sm:$0xff]
        %v641 = vld [vmem:[%s390 + $0x258] sm:$0xff]
        %v642 = vld [vmem:[%s390 + $0x260] sm:$0xff]
        %v643 = vld [vmem:[%s390 + $0x268] sm:$0xff]
        %v644 = vld [vmem:[%s390 + $0x270] sm:$0xff]
        %v645 = vld [vmem:[%s390 + $0x278] sm:$0xff]
        %v646 = vld [vmem:[%s390 + $0x280] sm:$0xff]
        %v647 = vld [vmem:[%s390 + $0x288] sm:$0xff]
        %v648 = vld [vmem:[%s390 + $0x290] sm:$0xff]
        %v649 = vld [vmem:[%s390 + $0x298] sm:$0xff]
        %v650 = vld [vmem:[%s390 + $0x2a0] sm:$0xff]
        %v651 = vld [vmem:[%s390 + $0x2a8] sm:$0xff]
        %v652 = vld [vmem:[%s390 + $0x2b0] sm:$0xff]
        %v653 = vld [vmem:[%s390 + $0x2b8] sm:$0xff]
        %v654 = vld [vmem:[%s390 + $0x2c0] sm:$0xff]
        %v655 = vld [vmem:[%s390 + $0x2c8] sm:$0xff]
        %v656 = vld [vmem:[%s390 + $0x2d0] sm:$0xff]
        %v657 = vld [vmem:[%s390 + $0x2d8] sm:$0xff]
        %v658 = vld [vmem:[%s390 + $0x2e0] sm:$0xff]
        %v659 = vld [vmem:[%s390 + $0x2e8] sm:$0xff]
        %v660 = vld [vmem:[%s390 + $0x2f0] sm:$0xff]
        %v661 = vld [vmem:[%s390 + $0x2f8] sm:$0xff]
        %v662 = vld [vmem:[%s390 + $0x300] sm:$0xff]
        %v663 = vld [vmem:[%s390 + $0x308] sm:$0xff]
        %v664 = vld [vmem:[%s390 + $0x310] sm:$0xff]
        %v665 = vld [vmem:[%s390 + $0x318] sm:$0xff]
        %v666 = vld [vmem:[%s390 + $0x320] sm:$0xff]
        %v667 = vld [vmem:[%s390 + $0x328] sm:$0xff]
        %v668 = vld [vmem:[%s390 + $0x330] sm:$0xff]
        %v669 = vld [vmem:[%s390 + $0x338] sm:$0xff]
        %v670 = vld [vmem:[%s390 + $0x340] sm:$0xff]
        %v671 = vld [vmem:[%s390 + $0x348] sm:$0xff]
        %v672 = vld [vmem:[%s390 + $0x350] sm:$0xff]
        %v673 = vld [vmem:[%s390 + $0x358] sm:$0xff]
        %v674 = vld [vmem:[%s390 + $0x360] sm:$0xff]
        %v675 = vld [vmem:[%s390 + $0x368] sm:$0xff]
        %v676 = vld [vmem:[%s390 + $0x370] sm:$0xff]
        %v677 = vld [vmem:[%s390 + $0x378] sm:$0xff]
        %v678 = vld [vmem:[%s390 + $0x380] sm:$0xff]
        %v679 = vld [vmem:[%s390 + $0x388] sm:$0xff]
        %v680 = vld [vmem:[%s390 + $0x390] sm:$0xff]
        %v681 = vld [vmem:[%s390 + $0x398] sm:$0xff]
        %v682 = vld [vmem:[%s390 + $0x3a0] sm:$0xff]
        %v683 = vld [vmem:[%s390 + $0x3a8] sm:$0xff]
        %v684 = vld [vmem:[%s390 + $0x3b0] sm:$0xff]
        %v685 = vld [vmem:[%s390 + $0x3b8] sm:$0xff]
        %v686 = vld [vmem:[%s390 + $0x3c0] sm:$0xff]
        %v687 = vld [vmem:[%s390 + $0x3c8] sm:$0xff]
        %v688 = vld [vmem:[%s390 + $0x3d0] sm:$0xff]
        %v689 = vld [vmem:[%s390 + $0x3d8] sm:$0xff]
        %v690 = vld [vmem:[%s390 + $0x3e0] sm:$0xff]
        %v691 = vld [vmem:[%s390 + $0x3e8] sm:$0xff]
        %v692 = vld [vmem:[%s390 + $0x3f0] sm:$0xff]
        %v693 = vld [vmem:[%s390 + $0x3f8] sm:$0xff]
        %v694 = vld [vmem:[%s390 + $0x400] sm:$0xff]
        %v695 = vld [vmem:[%s390 + $0x408] sm:$0xff]
        %v696 = vld [vmem:[%s390 + $0x410] sm:$0xff]
        %v697 = vld [vmem:[%s390 + $0x418] sm:$0xff]
        %v698 = vld [vmem:[%s390 + $0x420] sm:$0xff]
        %v699 = vld [vmem:[%s390 + $0x428] sm:$0xff]
        %v700 = vld [vmem:[%s390 + $0x430] sm:$0xff]
        %v701 = vld [vmem:[%s390 + $0x438] sm:$0xff]
        %v702 = vld [vmem:[%s390 + $0x440] sm:$0xff]
        %v703 = vld [vmem:[%s390 + $0x448] sm:$0xff]
        %v704 = vld [vmem:[%s390 + $0x450] sm:$0xff]
        %v705 = vld [vmem:[%s390 + $0x458] sm:$0xff]
        %v706 = vld [vmem:[%s390 + $0x460] sm:$0xff]
        %v707 = vld [vmem:[%s390 + $0x468] sm:$0xff]
        %v708 = vld [vmem:[%s390 + $0x470] sm:$0xff]
        %v709 = vld [vmem:[%s390 + $0x478] sm:$0xff]
        %v710 = vld [vmem:[%s390 + $0x480] sm:$0xff]
        %v711 = vld [vmem:[%s390 + $0x488] sm:$0xff]
        %v712 = vld [vmem:[%s390 + $0x490] sm:$0xff]
        %v713 = vld [vmem:[%s390 + $0x498] sm:$0xff]
        %v714 = vld [vmem:[%s390 + $0x4a0] sm:$0xff]
        %v715 = vld [vmem:[%s390 + $0x4a8] sm:$0xff]
        %v716 = vld [vmem:[%s390 + $0x4b0] sm:$0xff]
        %v717 = vld [vmem:[%s390 + $0x4b8] sm:$0xff]
        %v718 = vld [vmem:[%s390 + $0x4c0] sm:$0xff]
        %v719 = vld [vmem:[%s390 + $0x4c8] sm:$0xff]
        %v720 = vld [vmem:[%s390 + $0x4d0] sm:$0xff]
        %v721 = vld [vmem:[%s390 + $0x4d8] sm:$0xff]
        %v722 = vld [vmem:[%s390 + $0x4e0] sm:$0xff]
        %v723 = vld [vmem:[%s390 + $0x4e8] sm:$0xff]
        %v724 = vld [vmem:[%s390 + $0x4f0] sm:$0xff]
        %v725 = vld [vmem:[%s390 + $0x4f8] sm:$0xff]
        %v726 = vld [vmem:[%s390 + $0x500] sm:$0xff]
        %v727 = vld [vmem:[%s390 + $0x508] sm:$0xff]
        %v728 = vld [vmem:[%s390 + $0x510] sm:$0xff]
        %v729 = vld [vmem:[%s390 + $0x518] sm:$0xff]
        %v730 = vld [vmem:[%s390 + $0x520] sm:$0xff]
        %v731 = vld [vmem:[%s390 + $0x528] sm:$0xff]
        %v732 = vld [vmem:[%s390 + $0x530] sm:$0xff]
        %v733 = vld [vmem:[%s390 + $0x538] sm:$0xff]
        %v734 = vld [vmem:[%s390 + $0x540] sm:$0xff]
        %v735 = vld [vmem:[%s390 + $0x548] sm:$0xff]
        %v736 = vld [vmem:[%s390 + $0x550] sm:$0xff]
        %v737 = vld [vmem:[%s390 + $0x558] sm:$0xff]
        %v738 = vld [vmem:[%s390 + $0x560] sm:$0xff]
        %v739 = vld [vmem:[%s390 + $0x568] sm:$0xff]
        %v740 = vld [vmem:[%s390 + $0x570] sm:$0xff]
        %v741 = vld [vmem:[%s390 + $0x578] sm:$0xff]
        %v742 = vld [vmem:[%s390 + $0x580] sm:$0xff]
        %v743 = vld [vmem:[%s390 + $0x588] sm:$0xff]
        %v744 = vld [vmem:[%s390 + $0x590] sm:$0xff]
        %v745 = vld [vmem:[%s390 + $0x598] sm:$0xff]
        %v746 = vld [vmem:[%s390 + $0x5a0] sm:$0xff]
        %v747 = vld [vmem:[%s390 + $0x5a8] sm:$0xff]
        %v748 = vld [vmem:[%s390 + $0x5b0] sm:$0xff]
        %v749 = vld [vmem:[%s390 + $0x5b8] sm:$0xff]
        %v750 = vld [vmem:[%s390 + $0x5c0] sm:$0xff]
        %v751 = vld [vmem:[%s390 + $0x5c8] sm:$0xff]
        %v752 = vld [vmem:[%s390 + $0x5d0] sm:$0xff]
        %v753 = vld [vmem:[%s390 + $0x5d8] sm:$0xff]
        %v754 = vld [vmem:[%s390 + $0x5e0] sm:$0xff]
        %v755 = vld [vmem:[%s390 + $0x5e8] sm:$0xff]
        %v756 = vld [vmem:[%s390 + $0x5f0] sm:$0xff]
        %v757 = vld [vmem:[%s390 + $0x5f8] sm:$0xff]
        %v758 = vld [vmem:[%s390 + $0x600] sm:$0xff]
        %v759 = vld [vmem:[%s390 + $0x608] sm:$0xff]
        %v760 = vld [vmem:[%s390 + $0x610] sm:$0xff]
        %v761 = vld [vmem:[%s390 + $0x618] sm:$0xff]
        %v762 = vld [vmem:[%s390 + $0x620] sm:$0xff]
        %v763 = vld [vmem:[%s390 + $0x628] sm:$0xff]
        %v764 = vld [vmem:[%s390 + $0x630] sm:$0xff]
        %v765 = vld [vmem:[%s390 + $0x638] sm:$0xff]
        %v766 = vld [vmem:[%s390 + $0x640] sm:$0xff]
        %v767 = vld [vmem:[%s390 + $0x648] sm:$0xff]
        %v768 = vld [vmem:[%s390 + $0x650] sm:$0xff]
        %v769 = vld [vmem:[%s390 + $0x658] sm:$0xff]
        %v770 = vld [vmem:[%s390 + $0x660] sm:$0xff]
        %v771 = vld [vmem:[%s390 + $0x668] sm:$0xff]
        %v772 = vld [vmem:[%s390 + $0x670] sm:$0xff]
        %v773 = vld [vmem:[%s390 + $0x678] sm:$0xff]
        %v774 = vld [vmem:[%s390 + $0x680] sm:$0xff]
        %v775 = vld [vmem:[%s390 + $0x688] sm:$0xff]
        %v776 = vld [vmem:[%s390 + $0x690] sm:$0xff]
        %v777 = vld [vmem:[%s390 + $0x698] sm:$0xff]
        %v778 = vld [vmem:[%s390 + $0x6a0] sm:$0xff]
        %v779 = vld [vmem:[%s390 + $0x6a8] sm:$0xff]
        %v780 = vld [vmem:[%s390 + $0x6b0] sm:$0xff]
        %v781 = vld [vmem:[%s390 + $0x6b8] sm:$0xff]
        %v782 = vld [vmem:[%s390 + $0x6c0] sm:$0xff]
        %v783 = vld [vmem:[%s390 + $0x6c8] sm:$0xff]
        %v784 = vld [vmem:[%s390 + $0x6d0] sm:$0xff]
        %v785 = vld [vmem:[%s390 + $0x6d8] sm:$0xff]
        %v786 = vld [vmem:[%s390 + $0x6e0] sm:$0xff]
        %v787 = vld [vmem:[%s390 + $0x6e8] sm:$0xff]
        %v788 = vld [vmem:[%s390 + $0x6f0] sm:$0xff]
        %v789 = vld [vmem:[%s390 + $0x6f8] sm:$0xff]
        %v790 = vld [vmem:[%s390 + $0x700] sm:$0xff]
        %v791 = vld [vmem:[%s390 + $0x708] sm:$0xff]
        %v792 = vld [vmem:[%s390 + $0x710] sm:$0xff]
        %v793 = vld [vmem:[%s390 + $0x718] sm:$0xff]
        %v794 = vld [vmem:[%s390 + $0x720] sm:$0xff]
        %v795 = vld [vmem:[%s390 + $0x728] sm:$0xff]
        %v796 = vld [vmem:[%s390 + $0x730] sm:$0xff]
        %v797 = vld [vmem:[%s390 + $0x738] sm:$0xff]
        %v798 = vld [vmem:[%s390 + $0x740] sm:$0xff]
        %v799 = vld [vmem:[%s390 + $0x748] sm:$0xff]
        %v800 = vld [vmem:[%s390 + $0x750] sm:$0xff]
        %v801 = vld [vmem:[%s390 + $0x758] sm:$0xff]
        %v802 = vld [vmem:[%s390 + $0x760] sm:$0xff]
        %v803 = vld [vmem:[%s390 + $0x768] sm:$0xff]
        %v804 = vld [vmem:[%s390 + $0x770] sm:$0xff]
        %v805 = vld [vmem:[%s390 + $0x778] sm:$0xff]
        %v806 = vld [vmem:[%s390 + $0x780] sm:$0xff]
        %v807 = vld [vmem:[%s390 + $0x788] sm:$0xff]
        %v808 = vld [vmem:[%s390 + $0x790] sm:$0xff]
        %v809 = vld [vmem:[%s390 + $0x798] sm:$0xff]
        %v810 = vld [vmem:[%s390 + $0x7a0] sm:$0xff]
        %v811 = vld [vmem:[%s390 + $0x7a8] sm:$0xff]
        %v812 = vld [vmem:[%s390 + $0x7b0] sm:$0xff]
        %v813 = vld [vmem:[%s390 + $0x7b8] sm:$0xff]
        %v814 = vld [vmem:[%s390 + $0x7c0] sm:$0xff]
        %v815 = vld [vmem:[%s390 + $0x7c8] sm:$0xff]
        %v816 = vld [vmem:[%s390 + $0x7d0] sm:$0xff]
        %v817 = vld [vmem:[%s390 + $0x7d8] sm:$0xff]
        %v818 = vld [vmem:[%s390 + $0x7e0] sm:$0xff]
        %v819 = vld [vmem:[%s390 + $0x7e8] sm:$0xff]
        %v820 = vld [vmem:[%s390 + $0x7f0] sm:$0xff]
        %v821 = vld [vmem:[%s390 + $0x7f8] sm:$0xff]
        %v1078 = vunpack.c.l.b16 %v566
        %v1079 = vunpack.c.h.b16 %v566
        %v1080 = vunpack.c.l.b16 %v567
        %v1081 = vunpack.c.h.b16 %v567
        %v1082 = vunpack.c.l.b16 %v568
        %v1083 = vunpack.c.h.b16 %v568
        %v1084 = vunpack.c.l.b16 %v569
        %v1085 = vunpack.c.h.b16 %v569
        %v1086 = vunpack.c.l.b16 %v570
        %v1087 = vunpack.c.h.b16 %v570
        %v1088 = vunpack.c.l.b16 %v571
        %v1089 = vunpack.c.h.b16 %v571
        %v1090 = vunpack.c.l.b16 %v572
        %v1091 = vunpack.c.h.b16 %v572
        %v1092 = vunpack.c.l.b16 %v573
        %v1093 = vunpack.c.h.b16 %v573
        %v1094 = vunpack.c.l.b16 %v574
        %v1095 = vunpack.c.h.b16 %v574
        %v1096 = vunpack.c.l.b16 %v575
        %v1097 = vunpack.c.h.b16 %v575
        %v1098 = vunpack.c.l.b16 %v576
        %v1099 = vunpack.c.h.b16 %v576
        %v1100 = vunpack.c.l.b16 %v577
        %v1101 = vunpack.c.h.b16 %v577
        %v1102 = vunpack.c.l.b16 %v578
        %v1103 = vunpack.c.h.b16 %v578
        %v1104 = vunpack.c.l.b16 %v579
        %v1105 = vunpack.c.h.b16 %v579
        %v1106 = vunpack.c.l.b16 %v580
        %v1107 = vunpack.c.h.b16 %v580
        %v1108 = vunpack.c.l.b16 %v581
        %v1109 = vunpack.c.h.b16 %v581
        %v1110 = vunpack.c.l.b16 %v582
        %v1111 = vunpack.c.h.b16 %v582
        %v1112 = vunpack.c.l.b16 %v583
        %v1113 = vunpack.c.h.b16 %v583
        %v1114 = vunpack.c.l.b16 %v584
        %v1115 = vunpack.c.h.b16 %v584
        %v1116 = vunpack.c.l.b16 %v585
        %v1117 = vunpack.c.h.b16 %v585
        %v1118 = vunpack.c.l.b16 %v586
        %v1119 = vunpack.c.h.b16 %v586
        %v1120 = vunpack.c.l.b16 %v587
        %v1121 = vunpack.c.h.b16 %v587
        %v1122 = vunpack.c.l.b16 %v588
        %v1123 = vunpack.c.h.b16 %v588
        %v1124 = vunpack.c.l.b16 %v589
        %v1125 = vunpack.c.h.b16 %v589
        %v1126 = vunpack.c.l.b16 %v590
        %v1127 = vunpack.c.h.b16 %v590
        %v1128 = vunpack.c.l.b16 %v591
        %v1129 = vunpack.c.h.b16 %v591
        %v1130 = vunpack.c.l.b16 %v592
        %v1131 = vunpack.c.h.b16 %v592
        %v1132 = vunpack.c.l.b16 %v593
        %v1133 = vunpack.c.h.b16 %v593
        %v1134 = vunpack.c.l.b16 %v594
        %v1135 = vunpack.c.h.b16 %v594
        %v1136 = vunpack.c.l.b16 %v595
        %v1137 = vunpack.c.h.b16 %v595
        %v1138 = vunpack.c.l.b16 %v596
        %v1139 = vunpack.c.h.b16 %v596
        %v1140 = vunpack.c.l.b16 %v597
        %v1141 = vunpack.c.h.b16 %v597
        %v1142 = vunpack.c.l.b16 %v598
        %v1143 = vunpack.c.h.b16 %v598
        %v1144 = vunpack.c.l.b16 %v599
        %v1145 = vunpack.c.h.b16 %v599
        %v1146 = vunpack.c.l.b16 %v600
        %v1147 = vunpack.c.h.b16 %v600
        %v1148 = vunpack.c.l.b16 %v601
        %v1149 = vunpack.c.h.b16 %v601
        %v1150 = vunpack.c.l.b16 %v602
        %v1151 = vunpack.c.h.b16 %v602
        %v1152 = vunpack.c.l.b16 %v603
        %v1153 = vunpack.c.h.b16 %v603
        %v1154 = vunpack.c.l.b16 %v604
        %v1155 = vunpack.c.h.b16 %v604
        %v1156 = vunpack.c.l.b16 %v605
        %v1157 = vunpack.c.h.b16 %v605
        %v1158 = vunpack.c.l.b16 %v606
        %v1159 = vunpack.c.h.b16 %v606
        %v1160 = vunpack.c.l.b16 %v607
        %v1161 = vunpack.c.h.b16 %v607
        %v1162 = vunpack.c.l.b16 %v608
        %v1163 = vunpack.c.h.b16 %v608
        %v1164 = vunpack.c.l.b16 %v609
        %v1165 = vunpack.c.h.b16 %v609
        %v1166 = vunpack.c.l.b16 %v610
        %v1167 = vunpack.c.h.b16 %v610
        %v1168 = vunpack.c.l.b16 %v611
        %v1169 = vunpack.c.h.b16 %v611
        %v1170 = vunpack.c.l.b16 %v612
        %v1171 = vunpack.c.h.b16 %v612
        %v1172 = vunpack.c.l.b16 %v613
        %v1173 = vunpack.c.h.b16 %v613
        %v1174 = vunpack.c.l.b16 %v614
        %v1175 = vunpack.c.h.b16 %v614
        %v1176 = vunpack.c.l.b16 %v615
        %v1177 = vunpack.c.h.b16 %v615
        %v1178 = vunpack.c.l.b16 %v616
        %v1179 = vunpack.c.h.b16 %v616
        %v1180 = vunpack.c.l.b16 %v617
        %v1181 = vunpack.c.h.b16 %v617
        %v1182 = vunpack.c.l.b16 %v618
        %v1183 = vunpack.c.h.b16 %v618
        %v1184 = vunpack.c.l.b16 %v619
        %v1185 = vunpack.c.h.b16 %v619
        %v1186 = vunpack.c.l.b16 %v620
        %v1187 = vunpack.c.h.b16 %v620
        %v1188 = vunpack.c.l.b16 %v621
        %v1189 = vunpack.c.h.b16 %v621
        %v1190 = vunpack.c.l.b16 %v622
        %v1191 = vunpack.c.h.b16 %v622
        %v1192 = vunpack.c.l.b16 %v623
        %v1193 = vunpack.c.h.b16 %v623
        %v1194 = vunpack.c.l.b16 %v624
        %v1195 = vunpack.c.h.b16 %v624
        %v1196 = vunpack.c.l.b16 %v625
        %v1197 = vunpack.c.h.b16 %v625
        %v1198 = vunpack.c.l.b16 %v626
        %v1199 = vunpack.c.h.b16 %v626
        %v1200 = vunpack.c.l.b16 %v627
        %v1201 = vunpack.c.h.b16 %v627
        %v1202 = vunpack.c.l.b16 %v628
        %v1203 = vunpack.c.h.b16 %v628
        %v1204 = vunpack.c.l.b16 %v629
        %v1205 = vunpack.c.h.b16 %v629
        %v1206 = vunpack.c.l.b16 %v630
        %v1207 = vunpack.c.h.b16 %v630
        %v1208 = vunpack.c.l.b16 %v631
        %v1209 = vunpack.c.h.b16 %v631
        %v1210 = vunpack.c.l.b16 %v632
        %v1211 = vunpack.c.h.b16 %v632
        %v1212 = vunpack.c.l.b16 %v633
        %v1213 = vunpack.c.h.b16 %v633
        %v1214 = vunpack.c.l.b16 %v634
        %v1215 = vunpack.c.h.b16 %v634
        %v1216 = vunpack.c.l.b16 %v635
        %v1217 = vunpack.c.h.b16 %v635
        %v1218 = vunpack.c.l.b16 %v636
        %v1219 = vunpack.c.h.b16 %v636
        %v1220 = vunpack.c.l.b16 %v637
        %v1221 = vunpack.c.h.b16 %v637
        %v1222 = vunpack.c.l.b16 %v638
        %v1223 = vunpack.c.h.b16 %v638
        %v1224 = vunpack.c.l.b16 %v639
        %v1225 = vunpack.c.h.b16 %v639
        %v1226 = vunpack.c.l.b16 %v640
        %v1227 = vunpack.c.h.b16 %v640
        %v1228 = vunpack.c.l.b16 %v641
        %v1229 = vunpack.c.h.b16 %v641
        %v1230 = vunpack.c.l.b16 %v642
        %v1231 = vunpack.c.h.b16 %v642
        %v1232 = vunpack.c.l.b16 %v643
        %v1233 = vunpack.c.h.b16 %v643
        %v1234 = vunpack.c.l.b16 %v644
        %v1235 = vunpack.c.h.b16 %v644
        %v1236 = vunpack.c.l.b16 %v645
        %v1237 = vunpack.c.h.b16 %v645
        %v1238 = vunpack.c.l.b16 %v646
        %v1239 = vunpack.c.h.b16 %v646
        %v1240 = vunpack.c.l.b16 %v647
        %v1241 = vunpack.c.h.b16 %v647
        %v1242 = vunpack.c.l.b16 %v648
        %v1243 = vunpack.c.h.b16 %v648
        %v1244 = vunpack.c.l.b16 %v649
        %v1245 = vunpack.c.h.b16 %v649
        %v1246 = vunpack.c.l.b16 %v650
        %v1247 = vunpack.c.h.b16 %v650
        %v1248 = vunpack.c.l.b16 %v651
        %v1249 = vunpack.c.h.b16 %v651
        %v1250 = vunpack.c.l.b16 %v652
        %v1251 = vunpack.c.h.b16 %v652
        %v1252 = vunpack.c.l.b16 %v653
        %v1253 = vunpack.c.h.b16 %v653
        %v1254 = vunpack.c.l.b16 %v654
        %v1255 = vunpack.c.h.b16 %v654
        %v1256 = vunpack.c.l.b16 %v655
        %v1257 = vunpack.c.h.b16 %v655
        %v1258 = vunpack.c.l.b16 %v656
        %v1259 = vunpack.c.h.b16 %v656
        %v1260 = vunpack.c.l.b16 %v657
        %v1261 = vunpack.c.h.b16 %v657
        %v1262 = vunpack.c.l.b16 %v658
        %v1263 = vunpack.c.h.b16 %v658
        %v1264 = vunpack.c.l.b16 %v659
        %v1265 = vunpack.c.h.b16 %v659
        %v1266 = vunpack.c.l.b16 %v660
        %v1267 = vunpack.c.h.b16 %v660
        %v1268 = vunpack.c.l.b16 %v661
        %v1269 = vunpack.c.h.b16 %v661
        %v1270 = vunpack.c.l.b16 %v662
        %v1271 = vunpack.c.h.b16 %v662
        %v1272 = vunpack.c.l.b16 %v663
        %v1273 = vunpack.c.h.b16 %v663
        %v1274 = vunpack.c.l.b16 %v664
        %v1275 = vunpack.c.h.b16 %v664
        %v1276 = vunpack.c.l.b16 %v665
        %v1277 = vunpack.c.h.b16 %v665
        %v1278 = vunpack.c.l.b16 %v666
        %v1279 = vunpack.c.h.b16 %v666
        %v1280 = vunpack.c.l.b16 %v667
        %v1281 = vunpack.c.h.b16 %v667
        %v1282 = vunpack.c.l.b16 %v668
        %v1283 = vunpack.c.h.b16 %v668
        %v1284 = vunpack.c.l.b16 %v669
        %v1285 = vunpack.c.h.b16 %v669
        %v1286 = vunpack.c.l.b16 %v670
        %v1287 = vunpack.c.h.b16 %v670
        %v1288 = vunpack.c.l.b16 %v671
        %v1289 = vunpack.c.h.b16 %v671
        %v1290 = vunpack.c.l.b16 %v672
        %v1291 = vunpack.c.h.b16 %v672
        %v1292 = vunpack.c.l.b16 %v673
        %v1293 = vunpack.c.h.b16 %v673
        %v1294 = vunpack.c.l.b16 %v674
        %v1295 = vunpack.c.h.b16 %v674
        %v1296 = vunpack.c.l.b16 %v675
        %v1297 = vunpack.c.h.b16 %v675
        %v1298 = vunpack.c.l.b16 %v676
        %v1299 = vunpack.c.h.b16 %v676
        %v1300 = vunpack.c.l.b16 %v677
        %v1301 = vunpack.c.h.b16 %v677
        %v1302 = vunpack.c.l.b16 %v678
        %v1303 = vunpack.c.h.b16 %v678
        %v1304 = vunpack.c.l.b16 %v679
        %v1305 = vunpack.c.h.b16 %v679
        %v1306 = vunpack.c.l.b16 %v680
        %v1307 = vunpack.c.h.b16 %v680
        %v1308 = vunpack.c.l.b16 %v681
        %v1309 = vunpack.c.h.b16 %v681
        %v1310 = vunpack.c.l.b16 %v682
        %v1311 = vunpack.c.h.b16 %v682
        %v1312 = vunpack.c.l.b16 %v683
        %v1313 = vunpack.c.h.b16 %v683
        %v1314 = vunpack.c.l.b16 %v684
        %v1315 = vunpack.c.h.b16 %v684
        %v1316 = vunpack.c.l.b16 %v685
        %v1317 = vunpack.c.h.b16 %v685
        %v1318 = vunpack.c.l.b16 %v686
        %v1319 = vunpack.c.h.b16 %v686
        %v1320 = vunpack.c.l.b16 %v687
        %v1321 = vunpack.c.h.b16 %v687
        %v1322 = vunpack.c.l.b16 %v688
        %v1323 = vunpack.c.h.b16 %v688
        %v1324 = vunpack.c.l.b16 %v689
        %v1325 = vunpack.c.h.b16 %v689
        %v1326 = vunpack.c.l.b16 %v690
        %v1327 = vunpack.c.h.b16 %v690
        %v1328 = vunpack.c.l.b16 %v691
        %v1329 = vunpack.c.h.b16 %v691
        %v1330 = vunpack.c.l.b16 %v692
        %v1331 = vunpack.c.h.b16 %v692
        %v1332 = vunpack.c.l.b16 %v693
        %v1333 = vunpack.c.h.b16 %v693
        %v1334 = vunpack.c.l.b16 %v694
        %v1335 = vunpack.c.h.b16 %v694
        %v1336 = vunpack.c.l.b16 %v695
        %v1337 = vunpack.c.h.b16 %v695
        %v1338 = vunpack.c.l.b16 %v696
        %v1339 = vunpack.c.h.b16 %v696
        %v1340 = vunpack.c.l.b16 %v697
        %v1341 = vunpack.c.h.b16 %v697
        %v1342 = vunpack.c.l.b16 %v698
        %v1343 = vunpack.c.h.b16 %v698
        %v1344 = vunpack.c.l.b16 %v699
        %v1345 = vunpack.c.h.b16 %v699
        %v1346 = vunpack.c.l.b16 %v700
        %v1347 = vunpack.c.h.b16 %v700
        %v1348 = vunpack.c.l.b16 %v701
        %v1349 = vunpack.c.h.b16 %v701
        %v1350 = vunpack.c.l.b16 %v702
        %v1351 = vunpack.c.h.b16 %v702
        %v1352 = vunpack.c.l.b16 %v703
        %v1353 = vunpack.c.h.b16 %v703
        %v1354 = vunpack.c.l.b16 %v704
        %v1355 = vunpack.c.h.b16 %v704
        %v1356 = vunpack.c.l.b16 %v705
        %v1357 = vunpack.c.h.b16 %v705
        %v1358 = vunpack.c.l.b16 %v706
        %v1359 = vunpack.c.h.b16 %v706
        %v1360 = vunpack.c.l.b16 %v707
        %v1361 = vunpack.c.h.b16 %v707
        %v1362 = vunpack.c.l.b16 %v708
        %v1363 = vunpack.c.h.b16 %v708
        %v1364 = vunpack.c.l.b16 %v709
        %v1365 = vunpack.c.h.b16 %v709
        %v1366 = vunpack.c.l.b16 %v710
        %v1367 = vunpack.c.h.b16 %v710
        %v1368 = vunpack.c.l.b16 %v711
        %v1369 = vunpack.c.h.b16 %v711
        %v1370 = vunpack.c.l.b16 %v712
        %v1371 = vunpack.c.h.b16 %v712
        %v1372 = vunpack.c.l.b16 %v713
        %v1373 = vunpack.c.h.b16 %v713
        %v1374 = vunpack.c.l.b16 %v714
        %v1375 = vunpack.c.h.b16 %v714
        %v1376 = vunpack.c.l.b16 %v715
        %v1377 = vunpack.c.h.b16 %v715
        %v1378 = vunpack.c.l.b16 %v716
        %v1379 = vunpack.c.h.b16 %v716
        %v1380 = vunpack.c.l.b16 %v717
        %v1381 = vunpack.c.h.b16 %v717
        %v1382 = vunpack.c.l.b16 %v718
        %v1383 = vunpack.c.h.b16 %v718
        %v1384 = vunpack.c.l.b16 %v719
        %v1385 = vunpack.c.h.b16 %v719
        %v1386 = vunpack.c.l.b16 %v720
        %v1387 = vunpack.c.h.b16 %v720
        %v1388 = vunpack.c.l.b16 %v721
        %v1389 = vunpack.c.h.b16 %v721
        %v1390 = vunpack.c.l.b16 %v722
        %v1391 = vunpack.c.h.b16 %v722
        %v1392 = vunpack.c.l.b16 %v723
        %v1393 = vunpack.c.h.b16 %v723
        %v1394 = vunpack.c.l.b16 %v724
        %v1395 = vunpack.c.h.b16 %v724
        %v1396 = vunpack.c.l.b16 %v725
        %v1397 = vunpack.c.h.b16 %v725
        %v1398 = vunpack.c.l.b16 %v726
        %v1399 = vunpack.c.h.b16 %v726
        %v1400 = vunpack.c.l.b16 %v727
        %v1401 = vunpack.c.h.b16 %v727
        %v1402 = vunpack.c.l.b16 %v728
        %v1403 = vunpack.c.h.b16 %v728
        %v1404 = vunpack.c.l.b16 %v729
        %v1405 = vunpack.c.h.b16 %v729
        %v1406 = vunpack.c.l.b16 %v730
        %v1407 = vunpack.c.h.b16 %v730
        %v1408 = vunpack.c.l.b16 %v731
        %v1409 = vunpack.c.h.b16 %v731
        %v1410 = vunpack.c.l.b16 %v732
        %v1411 = vunpack.c.h.b16 %v732
        %v1412 = vunpack.c.l.b16 %v733
        %v1413 = vunpack.c.h.b16 %v733
        %v1414 = vunpack.c.l.b16 %v734
        %v1415 = vunpack.c.h.b16 %v734
        %v1416 = vunpack.c.l.b16 %v735
        %v1417 = vunpack.c.h.b16 %v735
        %v1418 = vunpack.c.l.b16 %v736
        %v1419 = vunpack.c.h.b16 %v736
        %v1420 = vunpack.c.l.b16 %v737
        %v1421 = vunpack.c.h.b16 %v737
        %v1422 = vunpack.c.l.b16 %v738
        %v1423 = vunpack.c.h.b16 %v738
        %v1424 = vunpack.c.l.b16 %v739
        %v1425 = vunpack.c.h.b16 %v739
        %v1426 = vunpack.c.l.b16 %v740
        %v1427 = vunpack.c.h.b16 %v740
        %v1428 = vunpack.c.l.b16 %v741
        %v1429 = vunpack.c.h.b16 %v741
        %v1430 = vunpack.c.l.b16 %v742
        %v1431 = vunpack.c.h.b16 %v742
        %v1432 = vunpack.c.l.b16 %v743
        %v1433 = vunpack.c.h.b16 %v743
        %v1434 = vunpack.c.l.b16 %v744
        %v1435 = vunpack.c.h.b16 %v744
        %v1436 = vunpack.c.l.b16 %v745
        %v1437 = vunpack.c.h.b16 %v745
        %v1438 = vunpack.c.l.b16 %v746
        %v1439 = vunpack.c.h.b16 %v746
        %v1440 = vunpack.c.l.b16 %v747
        %v1441 = vunpack.c.h.b16 %v747
        %v1442 = vunpack.c.l.b16 %v748
        %v1443 = vunpack.c.h.b16 %v748
        %v1444 = vunpack.c.l.b16 %v749
        %v1445 = vunpack.c.h.b16 %v749
        %v1446 = vunpack.c.l.b16 %v750
        %v1447 = vunpack.c.h.b16 %v750
        %v1448 = vunpack.c.l.b16 %v751
        %v1449 = vunpack.c.h.b16 %v751
        %v1450 = vunpack.c.l.b16 %v752
        %v1451 = vunpack.c.h.b16 %v752
        %v1452 = vunpack.c.l.b16 %v753
        %v1453 = vunpack.c.h.b16 %v753
        %v1454 = vunpack.c.l.b16 %v754
        %v1455 = vunpack.c.h.b16 %v754
        %v1456 = vunpack.c.l.b16 %v755
        %v1457 = vunpack.c.h.b16 %v755
        %v1458 = vunpack.c.l.b16 %v756
        %v1459 = vunpack.c.h.b16 %v756
        %v1460 = vunpack.c.l.b16 %v757
        %v1461 = vunpack.c.h.b16 %v757
        %v1462 = vunpack.c.l.b16 %v758
        %v1463 = vunpack.c.h.b16 %v758
        %v1464 = vunpack.c.l.b16 %v759
        %v1465 = vunpack.c.h.b16 %v759
        %v1466 = vunpack.c.l.b16 %v760
        %v1467 = vunpack.c.h.b16 %v760
        %v1468 = vunpack.c.l.b16 %v761
        %v1469 = vunpack.c.h.b16 %v761
        %v1470 = vunpack.c.l.b16 %v762
        %v1471 = vunpack.c.h.b16 %v762
        %v1472 = vunpack.c.l.b16 %v763
        %v1473 = vunpack.c.h.b16 %v763
        %v1474 = vunpack.c.l.b16 %v764
        %v1475 = vunpack.c.h.b16 %v764
        %v1476 = vunpack.c.l.b16 %v765
        %v1477 = vunpack.c.h.b16 %v765
        %v1478 = vunpack.c.l.b16 %v766
        %v1479 = vunpack.c.h.b16 %v766
        %v1480 = vunpack.c.l.b16 %v767
        %v1481 = vunpack.c.h.b16 %v767
        %v1482 = vunpack.c.l.b16 %v768
        %v1483 = vunpack.c.h.b16 %v768
        %v1484 = vunpack.c.l.b16 %v769
        %v1485 = vunpack.c.h.b16 %v769
        %v1486 = vunpack.c.l.b16 %v770
        %v1487 = vunpack.c.h.b16 %v770
        %v1488 = vunpack.c.l.b16 %v771
        %v1489 = vunpack.c.h.b16 %v771
        %v1490 = vunpack.c.l.b16 %v772
        %v1491 = vunpack.c.h.b16 %v772
        %v1492 = vunpack.c.l.b16 %v773
        %v1493 = vunpack.c.h.b16 %v773
        %v1494 = vunpack.c.l.b16 %v774
        %v1495 = vunpack.c.h.b16 %v774
        %v1496 = vunpack.c.l.b16 %v775
        %v1497 = vunpack.c.h.b16 %v775
        %v1498 = vunpack.c.l.b16 %v776
        %v1499 = vunpack.c.h.b16 %v776
        %v1500 = vunpack.c.l.b16 %v777
        %v1501 = vunpack.c.h.b16 %v777
        %v1502 = vunpack.c.l.b16 %v778
        %v1503 = vunpack.c.h.b16 %v778
        %v1504 = vunpack.c.l.b16 %v779
        %v1505 = vunpack.c.h.b16 %v779
        %v1506 = vunpack.c.l.b16 %v780
        %v1507 = vunpack.c.h.b16 %v780
        %v1508 = vunpack.c.l.b16 %v781
        %v1509 = vunpack.c.h.b16 %v781
        %v1510 = vunpack.c.l.b16 %v782
        %v1511 = vunpack.c.h.b16 %v782
        %v1512 = vunpack.c.l.b16 %v783
        %v1513 = vunpack.c.h.b16 %v783
        %v1514 = vunpack.c.l.b16 %v784
        %v1515 = vunpack.c.h.b16 %v784
        %v1516 = vunpack.c.l.b16 %v785
        %v1517 = vunpack.c.h.b16 %v785
        %v1518 = vunpack.c.l.b16 %v786
        %v1519 = vunpack.c.h.b16 %v786
        %v1520 = vunpack.c.l.b16 %v787
        %v1521 = vunpack.c.h.b16 %v787
        %v1522 = vunpack.c.l.b16 %v788
        %v1523 = vunpack.c.h.b16 %v788
        %v1524 = vunpack.c.l.b16 %v789
        %v1525 = vunpack.c.h.b16 %v789
        %v1526 = vunpack.c.l.b16 %v790
        %v1527 = vunpack.c.h.b16 %v790
        %v1528 = vunpack.c.l.b16 %v791
        %v1529 = vunpack.c.h.b16 %v791
        %v1530 = vunpack.c.l.b16 %v792
        %v1531 = vunpack.c.h.b16 %v792
        %v1532 = vunpack.c.l.b16 %v793
        %v1533 = vunpack.c.h.b16 %v793
        %v1534 = vunpack.c.l.b16 %v794
        %v1535 = vunpack.c.h.b16 %v794
        %v1536 = vunpack.c.l.b16 %v795
        %v1537 = vunpack.c.h.b16 %v795
        %v1538 = vunpack.c.l.b16 %v796
        %v1539 = vunpack.c.h.b16 %v796
        %v1540 = vunpack.c.l.b16 %v797
        %v1541 = vunpack.c.h.b16 %v797
        %v1542 = vunpack.c.l.b16 %v798
        %v1543 = vunpack.c.h.b16 %v798
        %v1544 = vunpack.c.l.b16 %v799
        %v1545 = vunpack.c.h.b16 %v799
        %v1546 = vunpack.c.l.b16 %v800
        %v1547 = vunpack.c.h.b16 %v800
        %v1548 = vunpack.c.l.b16 %v801
        %v1549 = vunpack.c.h.b16 %v801
        %v1550 = vunpack.c.l.b16 %v802
        %v1551 = vunpack.c.h.b16 %v802
        %v1552 = vunpack.c.l.b16 %v803
        %v1553 = vunpack.c.h.b16 %v803
        %v1554 = vunpack.c.l.b16 %v804
        %v1555 = vunpack.c.h.b16 %v804
        %v1556 = vunpack.c.l.b16 %v805
        %v1557 = vunpack.c.h.b16 %v805
        %v1558 = vunpack.c.l.b16 %v806
        %v1559 = vunpack.c.h.b16 %v806
        %v1560 = vunpack.c.l.b16 %v807
        %v1561 = vunpack.c.h.b16 %v807
        %v1562 = vunpack.c.l.b16 %v808
        %v1563 = vunpack.c.h.b16 %v808
        %v1564 = vunpack.c.l.b16 %v809
        %v1565 = vunpack.c.h.b16 %v809
        %v1566 = vunpack.c.l.b16 %v810
        %v1567 = vunpack.c.h.b16 %v810
        %v1568 = vunpack.c.l.b16 %v811
        %v1569 = vunpack.c.h.b16 %v811
        %v1570 = vunpack.c.l.b16 %v812
        %v1571 = vunpack.c.h.b16 %v812
        %v1572 = vunpack.c.l.b16 %v813
        %v1573 = vunpack.c.h.b16 %v813
        %v1574 = vunpack.c.l.b16 %v814
        %v1575 = vunpack.c.h.b16 %v814
        %v1576 = vunpack.c.l.b16 %v815
        %v1577 = vunpack.c.h.b16 %v815
        %v1578 = vunpack.c.l.b16 %v816
        %v1579 = vunpack.c.h.b16 %v816
        %v1580 = vunpack.c.l.b16 %v817
        %v1581 = vunpack.c.h.b16 %v817
        %v1582 = vunpack.c.l.b16 %v818
        %v1583 = vunpack.c.h.b16 %v818
        %v1584 = vunpack.c.l.b16 %v819
        %v1585 = vunpack.c.h.b16 %v819
        %v1586 = vunpack.c.l.b16 %v820
        %v1587 = vunpack.c.h.b16 %v820
        %v1588 = vunpack.c.l.b16 %v821
        %v1589 = vunpack.c.h.b16 %v821
        %v1590 = vpack.c.b16 %v1080, %v1078
        %v1591 = vpack.c.b16 %v1081, %v1079
        %v1592 = vpack.c.b16 %v1084, %v1082
        %v1593 = vpack.c.b16 %v1085, %v1083
        %v1594 = vpack.c.b16 %v1088, %v1086
        %v1595 = vpack.c.b16 %v1089, %v1087
        %v1596 = vpack.c.b16 %v1092, %v1090
        %v1597 = vpack.c.b16 %v1093, %v1091
        %v1598 = vpack.c.b16 %v1096, %v1094
        %v1599 = vpack.c.b16 %v1097, %v1095
        %v1600 = vpack.c.b16 %v1100, %v1098
        %v1601 = vpack.c.b16 %v1101, %v1099
        %v1602 = vpack.c.b16 %v1104, %v1102
        %v1603 = vpack.c.b16 %v1105, %v1103
        %v1604 = vpack.c.b16 %v1108, %v1106
        %v1605 = vpack.c.b16 %v1109, %v1107
        %v1606 = vpack.c.b16 %v1112, %v1110
        %v1607 = vpack.c.b16 %v1113, %v1111
        %v1608 = vpack.c.b16 %v1116, %v1114
        %v1609 = vpack.c.b16 %v1117, %v1115
        %v1610 = vpack.c.b16 %v1120, %v1118
        %v1611 = vpack.c.b16 %v1121, %v1119
        %v1612 = vpack.c.b16 %v1124, %v1122
        %v1613 = vpack.c.b16 %v1125, %v1123
        %v1614 = vpack.c.b16 %v1128, %v1126
        %v1615 = vpack.c.b16 %v1129, %v1127
        %v1616 = vpack.c.b16 %v1132, %v1130
        %v1617 = vpack.c.b16 %v1133, %v1131
        %v1618 = vpack.c.b16 %v1136, %v1134
        %v1619 = vpack.c.b16 %v1137, %v1135
        %v1620 = vpack.c.b16 %v1140, %v1138
        %v1621 = vpack.c.b16 %v1141, %v1139
        %v1622 = vpack.c.b16 %v1144, %v1142
        %v1623 = vpack.c.b16 %v1145, %v1143
        %v1624 = vpack.c.b16 %v1148, %v1146
        %v1625 = vpack.c.b16 %v1149, %v1147
        %v1626 = vpack.c.b16 %v1152, %v1150
        %v1627 = vpack.c.b16 %v1153, %v1151
        %v1628 = vpack.c.b16 %v1156, %v1154
        %v1629 = vpack.c.b16 %v1157, %v1155
        %v1630 = vpack.c.b16 %v1160, %v1158
        %v1631 = vpack.c.b16 %v1161, %v1159
        %v1632 = vpack.c.b16 %v1164, %v1162
        %v1633 = vpack.c.b16 %v1165, %v1163
        %v1634 = vpack.c.b16 %v1168, %v1166
        %v1635 = vpack.c.b16 %v1169, %v1167
        %v1636 = vpack.c.b16 %v1172, %v1170
        %v1637 = vpack.c.b16 %v1173, %v1171
        %v1638 = vpack.c.b16 %v1176, %v1174
        %v1639 = vpack.c.b16 %v1177, %v1175
        %v1640 = vpack.c.b16 %v1180, %v1178
        %v1641 = vpack.c.b16 %v1181, %v1179
        %v1642 = vpack.c.b16 %v1184, %v1182
        %v1643 = vpack.c.b16 %v1185, %v1183
        %v1644 = vpack.c.b16 %v1188, %v1186
        %v1645 = vpack.c.b16 %v1189, %v1187
        %v1646 = vpack.c.b16 %v1192, %v1190
        %v1647 = vpack.c.b16 %v1193, %v1191
        %v1648 = vpack.c.b16 %v1196, %v1194
        %v1649 = vpack.c.b16 %v1197, %v1195
        %v1650 = vpack.c.b16 %v1200, %v1198
        %v1651 = vpack.c.b16 %v1201, %v1199
        %v1652 = vpack.c.b16 %v1204, %v1202
        %v1653 = vpack.c.b16 %v1205, %v1203
        %v1654 = vpack.c.b16 %v1208, %v1206
        %v1655 = vpack.c.b16 %v1209, %v1207
        %v1656 = vpack.c.b16 %v1212, %v1210
        %v1657 = vpack.c.b16 %v1213, %v1211
        %v1658 = vpack.c.b16 %v1216, %v1214
        %v1659 = vpack.c.b16 %v1217, %v1215
        %v1660 = vpack.c.b16 %v1220, %v1218
        %v1661 = vpack.c.b16 %v1221, %v1219
        %v1662 = vpack.c.b16 %v1224, %v1222
        %v1663 = vpack.c.b16 %v1225, %v1223
        %v1664 = vpack.c.b16 %v1228, %v1226
        %v1665 = vpack.c.b16 %v1229, %v1227
        %v1666 = vpack.c.b16 %v1232, %v1230
        %v1667 = vpack.c.b16 %v1233, %v1231
        %v1668 = vpack.c.b16 %v1236, %v1234
        %v1669 = vpack.c.b16 %v1237, %v1235
        %v1670 = vpack.c.b16 %v1240, %v1238
        %v1671 = vpack.c.b16 %v1241, %v1239
        %v1672 = vpack.c.b16 %v1244, %v1242
        %v1673 = vpack.c.b16 %v1245, %v1243
        %v1674 = vpack.c.b16 %v1248, %v1246
        %v1675 = vpack.c.b16 %v1249, %v1247
        %v1676 = vpack.c.b16 %v1252, %v1250
        %v1677 = vpack.c.b16 %v1253, %v1251
        %v1678 = vpack.c.b16 %v1256, %v1254
        %v1679 = vpack.c.b16 %v1257, %v1255
        %v1680 = vpack.c.b16 %v1260, %v1258
        %v1681 = vpack.c.b16 %v1261, %v1259
        %v1682 = vpack.c.b16 %v1264, %v1262
        %v1683 = vpack.c.b16 %v1265, %v1263
        %v1684 = vpack.c.b16 %v1268, %v1266
        %v1685 = vpack.c.b16 %v1269, %v1267
        %v1686 = vpack.c.b16 %v1272, %v1270
        %v1687 = vpack.c.b16 %v1273, %v1271
        %v1688 = vpack.c.b16 %v1276, %v1274
        %v1689 = vpack.c.b16 %v1277, %v1275
        %v1690 = vpack.c.b16 %v1280, %v1278
        %v1691 = vpack.c.b16 %v1281, %v1279
        %v1692 = vpack.c.b16 %v1284, %v1282
        %v1693 = vpack.c.b16 %v1285, %v1283
        %v1694 = vpack.c.b16 %v1288, %v1286
        %v1695 = vpack.c.b16 %v1289, %v1287
        %v1696 = vpack.c.b16 %v1292, %v1290
        %v1697 = vpack.c.b16 %v1293, %v1291
        %v1698 = vpack.c.b16 %v1296, %v1294
        %v1699 = vpack.c.b16 %v1297, %v1295
        %v1700 = vpack.c.b16 %v1300, %v1298
        %v1701 = vpack.c.b16 %v1301, %v1299
        %v1702 = vpack.c.b16 %v1304, %v1302
        %v1703 = vpack.c.b16 %v1305, %v1303
        %v1704 = vpack.c.b16 %v1308, %v1306
        %v1705 = vpack.c.b16 %v1309, %v1307
        %v1706 = vpack.c.b16 %v1312, %v1310
        %v1707 = vpack.c.b16 %v1313, %v1311
        %v1708 = vpack.c.b16 %v1316, %v1314
        %v1709 = vpack.c.b16 %v1317, %v1315
        %v1710 = vpack.c.b16 %v1320, %v1318
        %v1711 = vpack.c.b16 %v1321, %v1319
        %v1712 = vpack.c.b16 %v1324, %v1322
        %v1713 = vpack.c.b16 %v1325, %v1323
        %v1714 = vpack.c.b16 %v1328, %v1326
        %v1715 = vpack.c.b16 %v1329, %v1327
        %v1716 = vpack.c.b16 %v1332, %v1330
        %v1717 = vpack.c.b16 %v1333, %v1331
        %v1718 = vpack.c.b16 %v1336, %v1334
        %v1719 = vpack.c.b16 %v1337, %v1335
        %v1720 = vpack.c.b16 %v1340, %v1338
        %v1721 = vpack.c.b16 %v1341, %v1339
        %v1722 = vpack.c.b16 %v1344, %v1342
        %v1723 = vpack.c.b16 %v1345, %v1343
        %v1724 = vpack.c.b16 %v1348, %v1346
        %v1725 = vpack.c.b16 %v1349, %v1347
        %v1726 = vpack.c.b16 %v1352, %v1350
        %v1727 = vpack.c.b16 %v1353, %v1351
        %v1728 = vpack.c.b16 %v1356, %v1354
        %v1729 = vpack.c.b16 %v1357, %v1355
        %v1730 = vpack.c.b16 %v1360, %v1358
        %v1731 = vpack.c.b16 %v1361, %v1359
        %v1732 = vpack.c.b16 %v1364, %v1362
        %v1733 = vpack.c.b16 %v1365, %v1363
        %v1734 = vpack.c.b16 %v1368, %v1366
        %v1735 = vpack.c.b16 %v1369, %v1367
        %v1736 = vpack.c.b16 %v1372, %v1370
        %v1737 = vpack.c.b16 %v1373, %v1371
        %v1738 = vpack.c.b16 %v1376, %v1374
        %v1739 = vpack.c.b16 %v1377, %v1375
        %v1740 = vpack.c.b16 %v1380, %v1378
        %v1741 = vpack.c.b16 %v1381, %v1379
        %v1742 = vpack.c.b16 %v1384, %v1382
        %v1743 = vpack.c.b16 %v1385, %v1383
        %v1744 = vpack.c.b16 %v1388, %v1386
        %v1745 = vpack.c.b16 %v1389, %v1387
        %v1746 = vpack.c.b16 %v1392, %v1390
        %v1747 = vpack.c.b16 %v1393, %v1391
        %v1748 = vpack.c.b16 %v1396, %v1394
        %v1749 = vpack.c.b16 %v1397, %v1395
        %v1750 = vpack.c.b16 %v1400, %v1398
        %v1751 = vpack.c.b16 %v1401, %v1399
        %v1752 = vpack.c.b16 %v1404, %v1402
        %v1753 = vpack.c.b16 %v1405, %v1403
        %v1754 = vpack.c.b16 %v1408, %v1406
        %v1755 = vpack.c.b16 %v1409, %v1407
        %v1756 = vpack.c.b16 %v1412, %v1410
        %v1757 = vpack.c.b16 %v1413, %v1411
        %v1758 = vpack.c.b16 %v1416, %v1414
        %v1759 = vpack.c.b16 %v1417, %v1415
        %v1760 = vpack.c.b16 %v1420, %v1418
        %v1761 = vpack.c.b16 %v1421, %v1419
        %v1762 = vpack.c.b16 %v1424, %v1422
        %v1763 = vpack.c.b16 %v1425, %v1423
        %v1764 = vpack.c.b16 %v1428, %v1426
        %v1765 = vpack.c.b16 %v1429, %v1427
        %v1766 = vpack.c.b16 %v1432, %v1430
        %v1767 = vpack.c.b16 %v1433, %v1431
        %v1768 = vpack.c.b16 %v1436, %v1434
        %v1769 = vpack.c.b16 %v1437, %v1435
        %v1770 = vpack.c.b16 %v1440, %v1438
        %v1771 = vpack.c.b16 %v1441, %v1439
        %v1772 = vpack.c.b16 %v1444, %v1442
        %v1773 = vpack.c.b16 %v1445, %v1443
        %v1774 = vpack.c.b16 %v1448, %v1446
        %v1775 = vpack.c.b16 %v1449, %v1447
        %v1776 = vpack.c.b16 %v1452, %v1450
        %v1777 = vpack.c.b16 %v1453, %v1451
        %v1778 = vpack.c.b16 %v1456, %v1454
        %v1779 = vpack.c.b16 %v1457, %v1455
        %v1780 = vpack.c.b16 %v1460, %v1458
        %v1781 = vpack.c.b16 %v1461, %v1459
        %v1782 = vpack.c.b16 %v1464, %v1462
        %v1783 = vpack.c.b16 %v1465, %v1463
        %v1784 = vpack.c.b16 %v1468, %v1466
        %v1785 = vpack.c.b16 %v1469, %v1467
        %v1786 = vpack.c.b16 %v1472, %v1470
        %v1787 = vpack.c.b16 %v1473, %v1471
        %v1788 = vpack.c.b16 %v1476, %v1474
        %v1789 = vpack.c.b16 %v1477, %v1475
        %v1790 = vpack.c.b16 %v1480, %v1478
        %v1791 = vpack.c.b16 %v1481, %v1479
        %v1792 = vpack.c.b16 %v1484, %v1482
        %v1793 = vpack.c.b16 %v1485, %v1483
        %v1794 = vpack.c.b16 %v1488, %v1486
        %v1795 = vpack.c.b16 %v1489, %v1487
        %v1796 = vpack.c.b16 %v1492, %v1490
        %v1797 = vpack.c.b16 %v1493, %v1491
        %v1798 = vpack.c.b16 %v1496, %v1494
        %v1799 = vpack.c.b16 %v1497, %v1495
        %v1800 = vpack.c.b16 %v1500, %v1498
        %v1801 = vpack.c.b16 %v1501, %v1499
        %v1802 = vpack.c.b16 %v1504, %v1502
        %v1803 = vpack.c.b16 %v1505, %v1503
        %v1804 = vpack.c.b16 %v1508, %v1506
        %v1805 = vpack.c.b16 %v1509, %v1507
        %v1806 = vpack.c.b16 %v1512, %v1510
        %v1807 = vpack.c.b16 %v1513, %v1511
        %v1808 = vpack.c.b16 %v1516, %v1514
        %v1809 = vpack.c.b16 %v1517, %v1515
        %v1810 = vpack.c.b16 %v1520, %v1518
        %v1811 = vpack.c.b16 %v1521, %v1519
        %v1812 = vpack.c.b16 %v1524, %v1522
        %v1813 = vpack.c.b16 %v1525, %v1523
        %v1814 = vpack.c.b16 %v1528, %v1526
        %v1815 = vpack.c.b16 %v1529, %v1527
        %v1816 = vpack.c.b16 %v1532, %v1530
        %v1817 = vpack.c.b16 %v1533, %v1531
        %v1818 = vpack.c.b16 %v1536, %v1534
        %v1819 = vpack.c.b16 %v1537, %v1535
        %v1820 = vpack.c.b16 %v1540, %v1538
        %v1821 = vpack.c.b16 %v1541, %v1539
        %v1822 = vpack.c.b16 %v1544, %v1542
        %v1823 = vpack.c.b16 %v1545, %v1543
        %v1824 = vpack.c.b16 %v1548, %v1546
        %v1825 = vpack.c.b16 %v1549, %v1547
        %v1826 = vpack.c.b16 %v1552, %v1550
        %v1827 = vpack.c.b16 %v1553, %v1551
        %v1828 = vpack.c.b16 %v1556, %v1554
        %v1829 = vpack.c.b16 %v1557, %v1555
        %v1830 = vpack.c.b16 %v1560, %v1558
        %v1831 = vpack.c.b16 %v1561, %v1559
        %v1832 = vpack.c.b16 %v1564, %v1562
        %v1833 = vpack.c.b16 %v1565, %v1563
        %v1834 = vpack.c.b16 %v1568, %v1566
        %v1835 = vpack.c.b16 %v1569, %v1567
        %v1836 = vpack.c.b16 %v1572, %v1570
        %v1837 = vpack.c.b16 %v1573, %v1571
        %v1838 = vpack.c.b16 %v1576, %v1574
        %v1839 = vpack.c.b16 %v1577, %v1575
        %v1840 = vpack.c.b16 %v1580, %v1578
        %v1841 = vpack.c.b16 %v1581, %v1579
        %v1842 = vpack.c.b16 %v1584, %v1582
        %v1843 = vpack.c.b16 %v1585, %v1583
        %v1844 = vpack.c.b16 %v1588, %v1586
        %v1845 = vpack.c.b16 %v1589, %v1587
        %2102 = vmatpush.bf16.msra.mxu0 %v1604
        %2103 = vmatpush.bf16.msra.mxu0 %v1602
        %2104 = vmatpush.bf16.msra.mxu0 %v1600
        %2105 = vmatpush.bf16.msra.mxu0 %v1598
        %2106 = vmatpush.bf16.msra.mxu0 %v1596
        %2107 = vmatpush.bf16.msra.mxu0 %v1594
        %2108 = vmatpush.bf16.msra.mxu0 %v1592
        %2109 = vmatpush.bf16.msra.mxu0 %v1590
        %2110 = vmatmul.bf16.gmra.mxu0 %v550
        %v2111 = vpop.f32.mrf.mxu0
        %v2112 = vadd.f32 0.0, %v2111
        %v2113 = vpop.f32.mrf.mxu0
        %2114 = vdwg.mxu0
        %2115 = vmatpush.bf16.msra.mxu0 %v1620
        %2116 = vmatpush.bf16.msra.mxu0 %v1618
        %2117 = vmatpush.bf16.msra.mxu0 %v1616
        %2118 = vmatpush.bf16.msra.mxu0 %v1614
        %2119 = vmatpush.bf16.msra.mxu0 %v1612
        %2120 = vmatpush.bf16.msra.mxu0 %v1610
        %2121 = vmatpush.bf16.msra.mxu0 %v1608
        %2122 = vmatpush.bf16.msra.mxu0 %v1606
        %2123 = vmatmul.bf16.gmra.mxu0 %v551
        %v2124 = vpop.f32.mrf.mxu0
        %v2125 = vadd.f32 %v2112, %v2124
        %v2126 = vpop.f32.mrf.mxu0
        %2127 = vdwg.mxu0
        %2128 = vmatpush.bf16.msra.mxu0 %v1636
        %2129 = vmatpush.bf16.msra.mxu0 %v1634
        %2130 = vmatpush.bf16.msra.mxu0 %v1632
        %2131 = vmatpush.bf16.msra.mxu0 %v1630
        %2132 = vmatpush.bf16.msra.mxu0 %v1628
        %2133 = vmatpush.bf16.msra.mxu0 %v1626
        %2134 = vmatpush.bf16.msra.mxu0 %v1624
        %2135 = vmatpush.bf16.msra.mxu0 %v1622
        %2136 = vmatmul.bf16.gmra.mxu0 %v552
        %v2137 = vpop.f32.mrf.mxu0
        %v2138 = vadd.f32 %v2125, %v2137
        %v2139 = vpop.f32.mrf.mxu0
        %2140 = vdwg.mxu0
        %2141 = vmatpush.bf16.msra.mxu0 %v1652
        %2142 = vmatpush.bf16.msra.mxu0 %v1650
        %2143 = vmatpush.bf16.msra.mxu0 %v1648
        %2144 = vmatpush.bf16.msra.mxu0 %v1646
        %2145 = vmatpush.bf16.msra.mxu0 %v1644
        %2146 = vmatpush.bf16.msra.mxu0 %v1642
        %2147 = vmatpush.bf16.msra.mxu0 %v1640
        %2148 = vmatpush.bf16.msra.mxu0 %v1638
        %2149 = vmatmul.bf16.gmra.mxu0 %v553
        %v2150 = vpop.f32.mrf.mxu0
        %v2151 = vadd.f32 %v2138, %v2150
        %v2152 = vpop.f32.mrf.mxu0
        %2153 = vdwg.mxu0
        %2154 = vmatpush.bf16.msra.mxu0 %v1668
        %2155 = vmatpush.bf16.msra.mxu0 %v1666
        %2156 = vmatpush.bf16.msra.mxu0 %v1664
        %2157 = vmatpush.bf16.msra.mxu0 %v1662
        %2158 = vmatpush.bf16.msra.mxu0 %v1660
        %2159 = vmatpush.bf16.msra.mxu0 %v1658
        %2160 = vmatpush.bf16.msra.mxu0 %v1656
        %2161 = vmatpush.bf16.msra.mxu0 %v1654
        %2162 = vmatmul.bf16.gmra.mxu0 %v554
        %v2163 = vpop.f32.mrf.mxu0
        %v2164 = vadd.f32 %v2151, %v2163
        %v2165 = vpop.f32.mrf.mxu0
        %2166 = vdwg.mxu0
        %2167 = vmatpush.bf16.msra.mxu0 %v1684
        %2168 = vmatpush.bf16.msra.mxu0 %v1682
        %2169 = vmatpush.bf16.msra.mxu0 %v1680
        %2170 = vmatpush.bf16.msra.mxu0 %v1678
        %2171 = vmatpush.bf16.msra.mxu0 %v1676
        %2172 = vmatpush.bf16.msra.mxu0 %v1674
        %2173 = vmatpush.bf16.msra.mxu0 %v1672
        %2174 = vmatpush.bf16.msra.mxu0 %v1670
        %2175 = vmatmul.bf16.gmra.mxu0 %v555
        %v2176 = vpop.f32.mrf.mxu0
        %v2177 = vadd.f32 %v2164, %v2176
        %v2178 = vpop.f32.mrf.mxu0
        %2179 = vdwg.mxu0
        %2180 = vmatpush.bf16.msra.mxu0 %v1700
        %2181 = vmatpush.bf16.msra.mxu0 %v1698
        %2182 = vmatpush.bf16.msra.mxu0 %v1696
        %2183 = vmatpush.bf16.msra.mxu0 %v1694
        %2184 = vmatpush.bf16.msra.mxu0 %v1692
        %2185 = vmatpush.bf16.msra.mxu0 %v1690
        %2186 = vmatpush.bf16.msra.mxu0 %v1688
        %2187 = vmatpush.bf16.msra.mxu0 %v1686
        %2188 = vmatmul.bf16.gmra.mxu0 %v556
        %v2189 = vpop.f32.mrf.mxu0
        %v2190 = vadd.f32 %v2177, %v2189
        %v2191 = vpop.f32.mrf.mxu0
        %2192 = vdwg.mxu0
        %2193 = vmatpush.bf16.msra.mxu0 %v1716
        %2194 = vmatpush.bf16.msra.mxu0 %v1714
        %2195 = vmatpush.bf16.msra.mxu0 %v1712
        %2196 = vmatpush.bf16.msra.mxu0 %v1710
        %2197 = vmatpush.bf16.msra.mxu0 %v1708
        %2198 = vmatpush.bf16.msra.mxu0 %v1706
        %2199 = vmatpush.bf16.msra.mxu0 %v1704
        %2200 = vmatpush.bf16.msra.mxu0 %v1702
        %2201 = vmatmul.bf16.gmra.mxu0 %v557
        %v2202 = vpop.f32.mrf.mxu0
        %v2203 = vadd.f32 %v2190, %v2202
        %v2204 = vpop.f32.mrf.mxu0
        %2205 = vdwg.mxu0
        %2206 = vmatpush.bf16.msra.mxu0 %v1732
        %2207 = vmatpush.bf16.msra.mxu0 %v1730
        %2208 = vmatpush.bf16.msra.mxu0 %v1728
        %2209 = vmatpush.bf16.msra.mxu0 %v1726
        %2210 = vmatpush.bf16.msra.mxu0 %v1724
        %2211 = vmatpush.bf16.msra.mxu0 %v1722
        %2212 = vmatpush.bf16.msra.mxu0 %v1720
        %2213 = vmatpush.bf16.msra.mxu0 %v1718
        %2214 = vmatmul.bf16.gmra.mxu0 %v558
        %v2215 = vpop.f32.mrf.mxu0
        %v2216 = vadd.f32 %v2203, %v2215
        %v2217 = vpop.f32.mrf.mxu0
        %2218 = vdwg.mxu0
        %2219 = vmatpush.bf16.msra.mxu0 %v1748
        %2220 = vmatpush.bf16.msra.mxu0 %v1746
        %2221 = vmatpush.bf16.msra.mxu0 %v1744
        %2222 = vmatpush.bf16.msra.mxu0 %v1742
        %2223 = vmatpush.bf16.msra.mxu0 %v1740
        %2224 = vmatpush.bf16.msra.mxu0 %v1738
        %2225 = vmatpush.bf16.msra.mxu0 %v1736
        %2226 = vmatpush.bf16.msra.mxu0 %v1734
        %2227 = vmatmul.bf16.gmra.mxu0 %v559
        %v2228 = vpop.f32.mrf.mxu0
        %v2229 = vadd.f32 %v2216, %v2228
        %v2230 = vpop.f32.mrf.mxu0
        %2231 = vdwg.mxu0
        %2232 = vmatpush.bf16.msra.mxu0 %v1764
        %2233 = vmatpush.bf16.msra.mxu0 %v1762
        %2234 = vmatpush.bf16.msra.mxu0 %v1760
        %2235 = vmatpush.bf16.msra.mxu0 %v1758
        %2236 = vmatpush.bf16.msra.mxu0 %v1756
        %2237 = vmatpush.bf16.msra.mxu0 %v1754
        %2238 = vmatpush.bf16.msra.mxu0 %v1752
        %2239 = vmatpush.bf16.msra.mxu0 %v1750
        %2240 = vmatmul.bf16.gmra.mxu0 %v560
        %v2241 = vpop.f32.mrf.mxu0
        %v2242 = vadd.f32 %v2229, %v2241
        %v2243 = vpop.f32.mrf.mxu0
        %2244 = vdwg.mxu0
        %2245 = vmatpush.bf16.msra.mxu0 %v1780
        %2246 = vmatpush.bf16.msra.mxu0 %v1778
        %2247 = vmatpush.bf16.msra.mxu0 %v1776
        %2248 = vmatpush.bf16.msra.mxu0 %v1774
        %2249 = vmatpush.bf16.msra.mxu0 %v1772
        %2250 = vmatpush.bf16.msra.mxu0 %v1770
        %2251 = vmatpush.bf16.msra.mxu0 %v1768
        %2252 = vmatpush.bf16.msra.mxu0 %v1766
        %2253 = vmatmul.bf16.gmra.mxu0 %v561
        %v2254 = vpop.f32.mrf.mxu0
        %v2255 = vadd.f32 %v2242, %v2254
        %v2256 = vpop.f32.mrf.mxu0
        %2257 = vdwg.mxu0
        %2258 = vmatpush.bf16.msra.mxu0 %v1796
        %2259 = vmatpush.bf16.msra.mxu0 %v1794
        %2260 = vmatpush.bf16.msra.mxu0 %v1792
        %2261 = vmatpush.bf16.msra.mxu0 %v1790
        %2262 = vmatpush.bf16.msra.mxu0 %v1788
        %2263 = vmatpush.bf16.msra.mxu0 %v1786
        %2264 = vmatpush.bf16.msra.mxu0 %v1784
        %2265 = vmatpush.bf16.msra.mxu0 %v1782
        %2266 = vmatmul.bf16.gmra.mxu0 %v562
        %v2267 = vpop.f32.mrf.mxu0
        %v2268 = vadd.f32 %v2255, %v2267
        %v2269 = vpop.f32.mrf.mxu0
        %2270 = vdwg.mxu0
        %2271 = vmatpush.bf16.msra.mxu0 %v1812
        %2272 = vmatpush.bf16.msra.mxu0 %v1810
        %2273 = vmatpush.bf16.msra.mxu0 %v1808
        %2274 = vmatpush.bf16.msra.mxu0 %v1806
        %2275 = vmatpush.bf16.msra.mxu0 %v1804
        %2276 = vmatpush.bf16.msra.mxu0 %v1802
        %2277 = vmatpush.bf16.msra.mxu0 %v1800
        %2278 = vmatpush.bf16.msra.mxu0 %v1798
        %2279 = vmatmul.bf16.gmra.mxu0 %v563
        %v2280 = vpop.f32.mrf.mxu0
        %v2281 = vadd.f32 %v2268, %v2280
        %v2282 = vpop.f32.mrf.mxu0
        %2283 = vdwg.mxu0
        %2284 = vmatpush.bf16.msra.mxu0 %v1828
        %2285 = vmatpush.bf16.msra.mxu0 %v1826
        %2286 = vmatpush.bf16.msra.mxu0 %v1824
        %2287 = vmatpush.bf16.msra.mxu0 %v1822
        %2288 = vmatpush.bf16.msra.mxu0 %v1820
        %2289 = vmatpush.bf16.msra.mxu0 %v1818
        %2290 = vmatpush.bf16.msra.mxu0 %v1816
        %2291 = vmatpush.bf16.msra.mxu0 %v1814
        %2292 = vmatmul.bf16.gmra.mxu0 %v564
        %v2293 = vpop.f32.mrf.mxu0
        %v2294 = vadd.f32 %v2281, %v2293
        %v2295 = vpop.f32.mrf.mxu0
        %2296 = vdwg.mxu0
        %2297 = vmatpush.bf16.msra.mxu0 %v1844
        %2298 = vmatpush.bf16.msra.mxu0 %v1842
        %2299 = vmatpush.bf16.msra.mxu0 %v1840
        %2300 = vmatpush.bf16.msra.mxu0 %v1838
        %2301 = vmatpush.bf16.msra.mxu0 %v1836
        %2302 = vmatpush.bf16.msra.mxu0 %v1834
        %2303 = vmatpush.bf16.msra.mxu0 %v1832
        %2304 = vmatpush.bf16.msra.mxu0 %v1830
        %2305 = vmatmul.bf16.gmra.mxu0 %v565
        %v2306 = vpop.f32.mrf.mxu0
        %v2307 = vadd.f32 %v2294, %v2306
        %v2308 = vpop.f32.mrf.mxu0
        %2309 = vdwg.mxu0
        %2310 = vmatpush.bf16.msra.mxu0 %v1605
        %2311 = vmatpush.bf16.msra.mxu0 %v1603
        %2312 = vmatpush.bf16.msra.mxu0 %v1601
        %2313 = vmatpush.bf16.msra.mxu0 %v1599
        %2314 = vmatpush.bf16.msra.mxu0 %v1597
        %2315 = vmatpush.bf16.msra.mxu0 %v1595
        %2316 = vmatpush.bf16.msra.mxu0 %v1593
        %2317 = vmatpush.bf16.msra.mxu0 %v1591
        %2318 = vmatmul.bf16.gmra.mxu0 %v550
        %v2319 = vpop.f32.mrf.mxu0
        %v2320 = vadd.f32 0.0, %v2319
        %v2321 = vpop.f32.mrf.mxu0
        %2322 = vdwg.mxu0
        %2323 = vmatpush.bf16.msra.mxu0 %v1621
        %2324 = vmatpush.bf16.msra.mxu0 %v1619
        %2325 = vmatpush.bf16.msra.mxu0 %v1617
        %2326 = vmatpush.bf16.msra.mxu0 %v1615
        %2327 = vmatpush.bf16.msra.mxu0 %v1613
        %2328 = vmatpush.bf16.msra.mxu0 %v1611
        %2329 = vmatpush.bf16.msra.mxu0 %v1609
        %2330 = vmatpush.bf16.msra.mxu0 %v1607
        %2331 = vmatmul.bf16.gmra.mxu0 %v551
        %v2332 = vpop.f32.mrf.mxu0
        %v2333 = vadd.f32 %v2320, %v2332
        %v2334 = vpop.f32.mrf.mxu0
        %2335 = vdwg.mxu0
        %2336 = vmatpush.bf16.msra.mxu0 %v1637
        %2337 = vmatpush.bf16.msra.mxu0 %v1635
        %2338 = vmatpush.bf16.msra.mxu0 %v1633
        %2339 = vmatpush.bf16.msra.mxu0 %v1631
        %2340 = vmatpush.bf16.msra.mxu0 %v1629
        %2341 = vmatpush.bf16.msra.mxu0 %v1627
        %2342 = vmatpush.bf16.msra.mxu0 %v1625
        %2343 = vmatpush.bf16.msra.mxu0 %v1623
        %2344 = vmatmul.bf16.gmra.mxu0 %v552
        %v2345 = vpop.f32.mrf.mxu0
        %v2346 = vadd.f32 %v2333, %v2345
        %v2347 = vpop.f32.mrf.mxu0
        %2348 = vdwg.mxu0
        %2349 = vmatpush.bf16.msra.mxu0 %v1653
        %2350 = vmatpush.bf16.msra.mxu0 %v1651
        %2351 = vmatpush.bf16.msra.mxu0 %v1649
        %2352 = vmatpush.bf16.msra.mxu0 %v1647
        %2353 = vmatpush.bf16.msra.mxu0 %v1645
        %2354 = vmatpush.bf16.msra.mxu0 %v1643
        %2355 = vmatpush.bf16.msra.mxu0 %v1641
        %2356 = vmatpush.bf16.msra.mxu0 %v1639
        %2357 = vmatmul.bf16.gmra.mxu0 %v553
        %v2358 = vpop.f32.mrf.mxu0
        %v2359 = vadd.f32 %v2346, %v2358
        %v2360 = vpop.f32.mrf.mxu0
        %2361 = vdwg.mxu0
        %2362 = vmatpush.bf16.msra.mxu0 %v1669
        %2363 = vmatpush.bf16.msra.mxu0 %v1667
        %2364 = vmatpush.bf16.msra.mxu0 %v1665
        %2365 = vmatpush.bf16.msra.mxu0 %v1663
        %2366 = vmatpush.bf16.msra.mxu0 %v1661
        %2367 = vmatpush.bf16.msra.mxu0 %v1659
        %2368 = vmatpush.bf16.msra.mxu0 %v1657
        %2369 = vmatpush.bf16.msra.mxu0 %v1655
        %2370 = vmatmul.bf16.gmra.mxu0 %v554
        %v2371 = vpop.f32.mrf.mxu0
        %v2372 = vadd.f32 %v2359, %v2371
        %v2373 = vpop.f32.mrf.mxu0
        %2374 = vdwg.mxu0
        %2375 = vmatpush.bf16.msra.mxu0 %v1685
        %2376 = vmatpush.bf16.msra.mxu0 %v1683
        %2377 = vmatpush.bf16.msra.mxu0 %v1681
        %2378 = vmatpush.bf16.msra.mxu0 %v1679
        %2379 = vmatpush.bf16.msra.mxu0 %v1677
        %2380 = vmatpush.bf16.msra.mxu0 %v1675
        %2381 = vmatpush.bf16.msra.mxu0 %v1673
        %2382 = vmatpush.bf16.msra.mxu0 %v1671
        %2383 = vmatmul.bf16.gmra.mxu0 %v555
        %v2384 = vpop.f32.mrf.mxu0
        %v2385 = vadd.f32 %v2372, %v2384
        %v2386 = vpop.f32.mrf.mxu0
        %2387 = vdwg.mxu0
        %2388 = vmatpush.bf16.msra.mxu0 %v1701
        %2389 = vmatpush.bf16.msra.mxu0 %v1699
        %2390 = vmatpush.bf16.msra.mxu0 %v1697
        %2391 = vmatpush.bf16.msra.mxu0 %v1695
        %2392 = vmatpush.bf16.msra.mxu0 %v1693
        %2393 = vmatpush.bf16.msra.mxu0 %v1691
        %2394 = vmatpush.bf16.msra.mxu0 %v1689
        %2395 = vmatpush.bf16.msra.mxu0 %v1687
        %2396 = vmatmul.bf16.gmra.mxu0 %v556
        %v2397 = vpop.f32.mrf.mxu0
        %v2398 = vadd.f32 %v2385, %v2397
        %v2399 = vpop.f32.mrf.mxu0
        %2400 = vdwg.mxu0
        %2401 = vmatpush.bf16.msra.mxu0 %v1717
        %2402 = vmatpush.bf16.msra.mxu0 %v1715
        %2403 = vmatpush.bf16.msra.mxu0 %v1713
        %2404 = vmatpush.bf16.msra.mxu0 %v1711
        %2405 = vmatpush.bf16.msra.mxu0 %v1709
        %2406 = vmatpush.bf16.msra.mxu0 %v1707
        %2407 = vmatpush.bf16.msra.mxu0 %v1705
        %2408 = vmatpush.bf16.msra.mxu0 %v1703
        %2409 = vmatmul.bf16.gmra.mxu0 %v557
        %v2410 = vpop.f32.mrf.mxu0
        %v2411 = vadd.f32 %v2398, %v2410
        %v2412 = vpop.f32.mrf.mxu0
        %2413 = vdwg.mxu0
        %2414 = vmatpush.bf16.msra.mxu0 %v1733
        %2415 = vmatpush.bf16.msra.mxu0 %v1731
        %2416 = vmatpush.bf16.msra.mxu0 %v1729
        %2417 = vmatpush.bf16.msra.mxu0 %v1727
        %2418 = vmatpush.bf16.msra.mxu0 %v1725
        %2419 = vmatpush.bf16.msra.mxu0 %v1723
        %2420 = vmatpush.bf16.msra.mxu0 %v1721
        %2421 = vmatpush.bf16.msra.mxu0 %v1719
        %2422 = vmatmul.bf16.gmra.mxu0 %v558
        %v2423 = vpop.f32.mrf.mxu0
        %v2424 = vadd.f32 %v2411, %v2423
        %v2425 = vpop.f32.mrf.mxu0
        %2426 = vdwg.mxu0
        %2427 = vmatpush.bf16.msra.mxu0 %v1749
        %2428 = vmatpush.bf16.msra.mxu0 %v1747
        %2429 = vmatpush.bf16.msra.mxu0 %v1745
        %2430 = vmatpush.bf16.msra.mxu0 %v1743
        %2431 = vmatpush.bf16.msra.mxu0 %v1741
        %2432 = vmatpush.bf16.msra.mxu0 %v1739
        %2433 = vmatpush.bf16.msra.mxu0 %v1737
        %2434 = vmatpush.bf16.msra.mxu0 %v1735
        %2435 = vmatmul.bf16.gmra.mxu0 %v559
        %v2436 = vpop.f32.mrf.mxu0
        %v2437 = vadd.f32 %v2424, %v2436
        %v2438 = vpop.f32.mrf.mxu0
        %2439 = vdwg.mxu0
        %2440 = vmatpush.bf16.msra.mxu0 %v1765
        %2441 = vmatpush.bf16.msra.mxu0 %v1763
        %2442 = vmatpush.bf16.msra.mxu0 %v1761
        %2443 = vmatpush.bf16.msra.mxu0 %v1759
        %2444 = vmatpush.bf16.msra.mxu0 %v1757
        %2445 = vmatpush.bf16.msra.mxu0 %v1755
        %2446 = vmatpush.bf16.msra.mxu0 %v1753
        %2447 = vmatpush.bf16.msra.mxu0 %v1751
        %2448 = vmatmul.bf16.gmra.mxu0 %v560
        %v2449 = vpop.f32.mrf.mxu0
        %v2450 = vadd.f32 %v2437, %v2449
        %v2451 = vpop.f32.mrf.mxu0
        %2452 = vdwg.mxu0
        %2453 = vmatpush.bf16.msra.mxu0 %v1781
        %2454 = vmatpush.bf16.msra.mxu0 %v1779
        %2455 = vmatpush.bf16.msra.mxu0 %v1777
        %2456 = vmatpush.bf16.msra.mxu0 %v1775
        %2457 = vmatpush.bf16.msra.mxu0 %v1773
        %2458 = vmatpush.bf16.msra.mxu0 %v1771
        %2459 = vmatpush.bf16.msra.mxu0 %v1769
        %2460 = vmatpush.bf16.msra.mxu0 %v1767
        %2461 = vmatmul.bf16.gmra.mxu0 %v561
        %v2462 = vpop.f32.mrf.mxu0
        %v2463 = vadd.f32 %v2450, %v2462
        %v2464 = vpop.f32.mrf.mxu0
        %2465 = vdwg.mxu0
        %2466 = vmatpush.bf16.msra.mxu0 %v1797
        %2467 = vmatpush.bf16.msra.mxu0 %v1795
        %2468 = vmatpush.bf16.msra.mxu0 %v1793
        %2469 = vmatpush.bf16.msra.mxu0 %v1791
        %2470 = vmatpush.bf16.msra.mxu0 %v1789
        %2471 = vmatpush.bf16.msra.mxu0 %v1787
        %2472 = vmatpush.bf16.msra.mxu0 %v1785
        %2473 = vmatpush.bf16.msra.mxu0 %v1783
        %2474 = vmatmul.bf16.gmra.mxu0 %v562
        %v2475 = vpop.f32.mrf.mxu0
        %v2476 = vadd.f32 %v2463, %v2475
        %v2477 = vpop.f32.mrf.mxu0
        %2478 = vdwg.mxu0
        %2479 = vmatpush.bf16.msra.mxu0 %v1813
        %2480 = vmatpush.bf16.msra.mxu0 %v1811
        %2481 = vmatpush.bf16.msra.mxu0 %v1809
        %2482 = vmatpush.bf16.msra.mxu0 %v1807
        %2483 = vmatpush.bf16.msra.mxu0 %v1805
        %2484 = vmatpush.bf16.msra.mxu0 %v1803
        %2485 = vmatpush.bf16.msra.mxu0 %v1801
        %2486 = vmatpush.bf16.msra.mxu0 %v1799
        %2487 = vmatmul.bf16.gmra.mxu0 %v563
        %v2488 = vpop.f32.mrf.mxu0
        %v2489 = vadd.f32 %v2476, %v2488
        %v2490 = vpop.f32.mrf.mxu0
        %2491 = vdwg.mxu0
        %2492 = vmatpush.bf16.msra.mxu0 %v1829
        %2493 = vmatpush.bf16.msra.mxu0 %v1827
        %2494 = vmatpush.bf16.msra.mxu0 %v1825
        %2495 = vmatpush.bf16.msra.mxu0 %v1823
        %2496 = vmatpush.bf16.msra.mxu0 %v1821
        %2497 = vmatpush.bf16.msra.mxu0 %v1819
        %2498 = vmatpush.bf16.msra.mxu0 %v1817
        %2499 = vmatpush.bf16.msra.mxu0 %v1815
        %2500 = vmatmul.bf16.gmra.mxu0 %v564
        %v2501 = vpop.f32.mrf.mxu0
        %v2502 = vadd.f32 %v2489, %v2501
        %v2503 = vpop.f32.mrf.mxu0
        %2504 = vdwg.mxu0
        %2505 = vmatpush.bf16.msra.mxu0 %v1845
        %2506 = vmatpush.bf16.msra.mxu0 %v1843
        %2507 = vmatpush.bf16.msra.mxu0 %v1841
        %2508 = vmatpush.bf16.msra.mxu0 %v1839
        %2509 = vmatpush.bf16.msra.mxu0 %v1837
        %2510 = vmatpush.bf16.msra.mxu0 %v1835
        %2511 = vmatpush.bf16.msra.mxu0 %v1833
        %2512 = vmatpush.bf16.msra.mxu0 %v1831
        %2513 = vmatmul.bf16.gmra.mxu0 %v565
        %v2514 = vpop.f32.mrf.mxu0
        %v2515 = vadd.f32 %v2502, %v2514
        %v2516 = vpop.f32.mrf.mxu0
        %2517 = vdwg.mxu0
        %v2518 = vadd.f32 %v461, %v2307
        %v2519 = vadd.f32 %v462, %v2515
        %2520 = vst [vmem:[#allocation2] sm:$0xff] %v2518
        %2521 = vst [vmem:[#allocation2 + $0x8] sm:$0xff] %v2519
        %p2522 = scmp.eq.s32.totalorder %s30, 7
        // Predicated region
        $region100: #{linear_forward.1} parent=66 // pred_check
          %p2523 = pneg %p2522
        $region101: #{linear_forward.1} parent=66 // pred_check_branch
          %2525 = sbr.rel (%p2523) target = $region103
        $region102: #{linear_forward.1} parent=66 // pred_region
          %v2526 = vld [vmem:[#allocation2] sm:$0xff]
          %v2527 = vld [vmem:[#allocation2 + $0x8] sm:$0xff]
          %v2528 = vld [vmem:[#allocation7] sm:$0x3]
          %v2530 = vperm.slane %v2528, 0
          %v2531 = vperm.slane %v2528, 1
          %v2534 = vadd.f32 %v2526, %v2530
          %v2535 = vadd.f32 %v2527, %v2531
          %v2536 = vmax.f32 %v2534, 0.0
          %v2537 = vmax.f32 %v2535, 0.0
          %v2538 = vpack.c.bf16 %v2536, %v2536
          %v2539 = vpack.c.bf16 %v2537, %v2537
          %v2540 = vld [vmem:[#allocation9] sm:$0xf]
          %v2541 = vld [vmem:[#allocation9 + $0x4] sm:$0xf]
          %v2542 = vld [vmem:[#allocation9 + $0x8] sm:$0xf]
          %v2543 = vld [vmem:[#allocation9 + $0xc] sm:$0xf]
          %v2544 = vld [vmem:[#allocation9 + $0x10] sm:$0xf]
          %v2545 = vld [vmem:[#allocation9 + $0x14] sm:$0xf]
          %v2546 = vld [vmem:[#allocation9 + $0x18] sm:$0xf]
          %v2547 = vld [vmem:[#allocation9 + $0x1c] sm:$0xf]
          %v2548 = vld [vmem:[#allocation9 + $0x20] sm:$0xf]
          %v2549 = vld [vmem:[#allocation9 + $0x24] sm:$0xf]
          %v2550 = vld [vmem:[#allocation9 + $0x28] sm:$0xf]
          %v2551 = vld [vmem:[#allocation9 + $0x2c] sm:$0xf]
          %v2552 = vld [vmem:[#allocation9 + $0x30] sm:$0xf]
          %v2553 = vld [vmem:[#allocation9 + $0x34] sm:$0xf]
          %v2554 = vld [vmem:[#allocation9 + $0x38] sm:$0xf]
          %v2555 = vld [vmem:[#allocation9 + $0x3c] sm:$0xf]
          %v2556 = vld [vmem:[#allocation9 + $0x40] sm:$0xf]
          %v2557 = vld [vmem:[#allocation9 + $0x44] sm:$0xf]
          %v2558 = vld [vmem:[#allocation9 + $0x48] sm:$0xf]
          %v2559 = vld [vmem:[#allocation9 + $0x4c] sm:$0xf]
          %v2560 = vld [vmem:[#allocation9 + $0x50] sm:$0xf]
          %v2561 = vld [vmem:[#allocation9 + $0x54] sm:$0xf]
          %v2562 = vld [vmem:[#allocation9 + $0x58] sm:$0xf]
          %v2563 = vld [vmem:[#allocation9 + $0x5c] sm:$0xf]
          %v2564 = vld [vmem:[#allocation9 + $0x60] sm:$0xf]
          %v2565 = vld [vmem:[#allocation9 + $0x64] sm:$0xf]
          %v2566 = vld [vmem:[#allocation9 + $0x68] sm:$0xf]
          %v2567 = vld [vmem:[#allocation9 + $0x6c] sm:$0xf]
          %v2568 = vld [vmem:[#allocation9 + $0x70] sm:$0xf]
          %v2569 = vld [vmem:[#allocation9 + $0x74] sm:$0xf]
          %v2570 = vld [vmem:[#allocation9 + $0x78] sm:$0xf]
          %v2571 = vld [vmem:[#allocation9 + $0x7c] sm:$0xf]
          %v2572 = vld [vmem:[#allocation10] sm:$0x1]
          %v2574 = vperm.slane %v2572, 0
          %v2608 = vunpack.c.l.b16 %v2540
          %v2609 = vunpack.c.l.b16 %v2541
          %v2610 = vunpack.c.l.b16 %v2542
          %v2611 = vunpack.c.l.b16 %v2543
          %v2612 = vunpack.c.l.b16 %v2544
          %v2613 = vunpack.c.l.b16 %v2545
          %v2614 = vunpack.c.l.b16 %v2546
          %v2615 = vunpack.c.l.b16 %v2547
          %v2616 = vunpack.c.l.b16 %v2548
          %v2617 = vunpack.c.l.b16 %v2549
          %v2618 = vunpack.c.l.b16 %v2550
          %v2619 = vunpack.c.l.b16 %v2551
          %v2620 = vunpack.c.l.b16 %v2552
          %v2621 = vunpack.c.l.b16 %v2553
          %v2622 = vunpack.c.l.b16 %v2554
          %v2623 = vunpack.c.l.b16 %v2555
          %v2624 = vunpack.c.l.b16 %v2556
          %v2625 = vunpack.c.l.b16 %v2557
          %v2626 = vunpack.c.l.b16 %v2558
          %v2627 = vunpack.c.l.b16 %v2559
          %v2628 = vunpack.c.l.b16 %v2560
          %v2629 = vunpack.c.l.b16 %v2561
          %v2630 = vunpack.c.l.b16 %v2562
          %v2631 = vunpack.c.l.b16 %v2563
          %v2632 = vunpack.c.l.b16 %v2564
          %v2633 = vunpack.c.l.b16 %v2565
          %v2634 = vunpack.c.l.b16 %v2566
          %v2635 = vunpack.c.l.b16 %v2567
          %v2636 = vunpack.c.l.b16 %v2568
          %v2637 = vunpack.c.l.b16 %v2569
          %v2638 = vunpack.c.l.b16 %v2570
          %v2639 = vunpack.c.l.b16 %v2571
          %v2640 = vpack.c.b16 %v2609, %v2608
          %v2641 = vpack.c.b16 %v2611, %v2610
          %v2642 = vpack.c.b16 %v2613, %v2612
          %v2643 = vpack.c.b16 %v2615, %v2614
          %v2644 = vpack.c.b16 %v2617, %v2616
          %v2645 = vpack.c.b16 %v2619, %v2618
          %v2646 = vpack.c.b16 %v2621, %v2620
          %v2647 = vpack.c.b16 %v2623, %v2622
          %v2648 = vpack.c.b16 %v2625, %v2624
          %v2649 = vpack.c.b16 %v2627, %v2626
          %v2650 = vpack.c.b16 %v2629, %v2628
          %v2651 = vpack.c.b16 %v2631, %v2630
          %v2652 = vpack.c.b16 %v2633, %v2632
          %v2653 = vpack.c.b16 %v2635, %v2634
          %v2654 = vpack.c.b16 %v2637, %v2636
          %v2655 = vpack.c.b16 %v2639, %v2638
          %2672 = vmatpush.bf16.msra.mxu0 %v2647
          %2673 = vmatpush.bf16.msra.mxu0 %v2646
          %2674 = vmatpush.bf16.msra.mxu0 %v2645
          %2675 = vmatpush.bf16.msra.mxu0 %v2644
          %2676 = vmatpush.bf16.msra.mxu0 %v2643
          %2677 = vmatpush.bf16.msra.mxu0 %v2642
          %2678 = vmatpush.bf16.msra.mxu0 %v2641
          %2679 = vmatpush.bf16.msra.mxu0 %v2640
          %2680 = vmatmul.bf16.gmra.mxu0 %v2538
          %v2681 = vpop.f32.mrf.mxu0
          %v2682 = vadd.f32 %v2574, %v2681
          %v2683 = vpop.f32.mrf.mxu0
          %2684 = vdwg.mxu0
          %2685 = vmatpush.bf16.msra.mxu0 %v2655
          %2686 = vmatpush.bf16.msra.mxu0 %v2654
          %2687 = vmatpush.bf16.msra.mxu0 %v2653
          %2688 = vmatpush.bf16.msra.mxu0 %v2652
          %2689 = vmatpush.bf16.msra.mxu0 %v2651
          %2690 = vmatpush.bf16.msra.mxu0 %v2650
          %2691 = vmatpush.bf16.msra.mxu0 %v2649
          %2692 = vmatpush.bf16.msra.mxu0 %v2648
          %2693 = vmatmul.bf16.gmra.mxu0 %v2539
          %v2694 = vpop.f32.mrf.mxu0
          %v2695 = vadd.f32 %v2682, %v2694
          %v2696 = vpop.f32.mrf.mxu0
          %2697 = vdwg.mxu0
          %v2698 = vmax.f32 %v2695, 0.0
          %v2699 = vpack.c.bf16 %v2698, %v2698
          %v2700 = vld [vmem:[#allocation12] sm:$0xf]
          %v2701 = vld [vmem:[#allocation12 + $0x4] sm:$0xf]
          %v2702 = vld [vmem:[#allocation12 + $0x8] sm:$0xf]
          %v2703 = vld [vmem:[#allocation12 + $0xc] sm:$0xf]
          %v2704 = vld [vmem:[#allocation12 + $0x10] sm:$0xf]
          %v2705 = vld [vmem:[#allocation12 + $0x14] sm:$0xf]
          %v2706 = vld [vmem:[#allocation12 + $0x18] sm:$0xf]
          %v2707 = vld [vmem:[#allocation12 + $0x1c] sm:$0xf]
          %v2708 = vld [vmem:[#allocation12 + $0x20] sm:$0xf]
          %v2709 = vld [vmem:[#allocation12 + $0x24] sm:$0xf]
          %v2710 = vld [vmem:[#allocation12 + $0x28] sm:$0xf]
          %v2711 = vld [vmem:[#allocation12 + $0x2c] sm:$0xf]
          %v2712 = vld [vmem:[#allocation12 + $0x30] sm:$0xf]
          %v2713 = vld [vmem:[#allocation12 + $0x34] sm:$0xf]
          %v2714 = vld [vmem:[#allocation12 + $0x38] sm:$0xf]
          %v2715 = vld [vmem:[#allocation12 + $0x3c] sm:$0xf]
          %v2716 = vld [vmem:[#allocation13] sm:$0x1]
          %v2718 = vperm.slane %v2716, 0
          %v2736 = vunpack.c.l.b16 %v2700
          %v2737 = vunpack.c.l.b16 %v2701
          %v2738 = vunpack.c.l.b16 %v2702
          %v2739 = vunpack.c.l.b16 %v2703
          %v2740 = vunpack.c.l.b16 %v2704
          %v2741 = vunpack.c.l.b16 %v2705
          %v2742 = vunpack.c.l.b16 %v2706
          %v2743 = vunpack.c.l.b16 %v2707
          %v2744 = vunpack.c.l.b16 %v2708
          %v2745 = vunpack.c.l.b16 %v2709
          %v2746 = vunpack.c.l.b16 %v2710
          %v2747 = vunpack.c.l.b16 %v2711
          %v2748 = vunpack.c.l.b16 %v2712
          %v2749 = vunpack.c.l.b16 %v2713
          %v2750 = vunpack.c.l.b16 %v2714
          %v2751 = vunpack.c.l.b16 %v2715
          %v2752 = vpack.c.b16 %v2737, %v2736
          %v2753 = vpack.c.b16 %v2739, %v2738
          %v2754 = vpack.c.b16 %v2741, %v2740
          %v2755 = vpack.c.b16 %v2743, %v2742
          %v2756 = vpack.c.b16 %v2745, %v2744
          %v2757 = vpack.c.b16 %v2747, %v2746
          %v2758 = vpack.c.b16 %v2749, %v2748
          %v2759 = vpack.c.b16 %v2751, %v2750
          %2768 = vmatpush.bf16.msra.mxu0 %v2759
          %2769 = vmatpush.bf16.msra.mxu0 %v2758
          %2770 = vmatpush.bf16.msra.mxu0 %v2757
          %2771 = vmatpush.bf16.msra.mxu0 %v2756
          %2772 = vmatpush.bf16.msra.mxu0 %v2755
          %2773 = vmatpush.bf16.msra.mxu0 %v2754
          %2774 = vmatpush.bf16.msra.mxu0 %v2753
          %2775 = vmatpush.bf16.msra.mxu0 %v2752
          %2776 = vmatmul.bf16.gmra.mxu0 %v2699
          %v2777 = vpop.f32.mrf.mxu0
          %v2778 = vadd.f32 %v2718, %v2777
          %v2779 = vpop.f32.mrf.mxu0
          %2780 = vdwg.mxu0
          %2781 = vst [vmem:[#allocation15] sm:$0xff] %v2778
        $region103: #{linear_forward.1} parent=66 // pred_fallthru
          _
        // Predicated region
        $region104: #{linear_forward.1} parent=66 // pred_check
          %p2782 = pneg %p214
        $region105: #{linear_forward.1} parent=66 // pred_check_branch
          %2784 = sbr.rel (%p2782) target = $region107
        $region106: #{linear_forward.1} parent=66 // pred_region
          %s2785 = smul.u32 4, %s29
          %s2786 = ssub.s32 1, %s2785
          %s2787 = smul.u32 2, %s2786
          %s2788 = ssub.s32 8, %s2787
          %s2789 = sshll.u32 %s2788, 4
          %2790 = vsyncadd [#allocation6], %s2789
          %p2791 = scmp.ne.s32.totalorder 0, %s2787
          %s2792 = smul.addr %s2785, 2
          %s2793 = scalar_lea.hbm %s7, %s2792
          %s2794 = smul.u32 2, %s2786
          %s2795 = sshll.u32 [#allocation15], 4
          %s2796 = int_to_ptr.vmem [resolvable:$true] %s2795
          %s2797 = sshll.u32 %s2793, 4
          %s2798 = int_to_ptr.hbm [resolvable:$true] %s2797
          %s2799 = sshll.u32 %s2794, 4
          %2803 = dma.vmem_to_hbm [thread:$0]  (%p2791), %s2796, %s2799, %s2798, [#allocation6], 32, 32, 2
        $region107: #{linear_forward.1} parent=66 // pred_fallthru
          _
        // Predicated region
        $region108: #{linear_forward.1} parent=66 // pred_check
          %p2804 = pneg %p214
        $region109: #{linear_forward.1} parent=66 // pred_check_branch
          %2806 = sbr.rel (%p2804) target = $region111
        $region110: #{linear_forward.1} parent=66 // pred_region
          %2808 = dma.done [#allocation6], 128
        $region111: #{linear_forward.1} parent=66 // pred_fallthru
          _
      $region67: #{linear_forward.1} parent=5 // pred_fallthru
        _
      %p2809 = scmp.le.s32.totalorder 2, %s20
      // Predicated region
      $region112: #{linear_forward.1} parent=5 // pred_check
        %p2810 = pneg %p2809
      $region113: #{linear_forward.1} parent=5 // pred_check_branch
        %2812 = sbr.rel (%p2810) target = $region115
      $region114: #{linear_forward.1} parent=5 // pred_region
        %s2813 = ssub.s32 %s20, 2
      $region115: #{linear_forward.1} parent=5 // pred_fallthru
        _
    $region6: #{linear_forward.1} parent=1 // loop_footer
      %s24 = sadd.s32 1, %s20
    $region7: #{linear_forward.1} parent=1 // loop_footer_branch
      %19 = sbr.rel target = $region3
    $region8: #{linear_forward.1} parent=1 // loop_exit
      _
    %2814 = vsyncpa [#allocation5], 1
    %s2815 = scalar_lea.sflag [#allocation5], 1
    %2816 = vsyncpa %s2815, 1
    %2817 = vsyncpa [#allocation8], 1
    %2818 = vsyncpa [#allocation11], 1
    %2819 = vsyncpa [#allocation14], 1
    %2820 = vsyncpa [#allocation6], 1
    %s2821 = scalar_lea.sflag [#allocation6], 1
    %2822 = vsyncpa %s2821, 1

</llo_original>
